<compile_context>
chip_gen: v6e
topology: v6e:2x2x1
jax: 0.10.0
libtpu: 0.0.40
codegen_flags: <defaults>
</compile_context>

<pallas_src>
import functools

import jax
import jax.numpy as jnp
from jax.experimental import pallas as pl
from jax.experimental.pallas import tpu as pltpu

LANE = 128
SUBLANE = 8


def _round_up(x, m):
    return (x + m - 1) // m * m


# -----------------------------------------------------------------------------
# Recurrent Pallas kernel (sequential over time, chunked).
# -----------------------------------------------------------------------------
def _lstm_recurrent_kernel(gx_ref, whh_ref, out_ref, h_scr, c_scr, *,
                           hidden_pad, t_chunk):
    """gx_ref : (t_chunk, B_pad, 4*H_pad) f32 -- precomputed x@W_ih + bias
       whh_ref: (H_pad, 4*H_pad)          bf16 -- recurrent weight, gates lane-aligned
       out_ref: (t_chunk, B_pad, H_pad)   f32 -- hidden-state outputs
       h_scr/c_scr: (B_pad, H_pad) f32 VMEM carries across grid steps."""
    Hp = hidden_pad

    @pl.when(pl.program_id(0) == 0)
    def _():
        h_scr[...] = jnp.zeros_like(h_scr)
        c_scr[...] = jnp.zeros_like(c_scr)

    whh = whh_ref[...]  # hoist the (H_pad, 4*H_pad) bf16 weight load out of the loop

    # Static unroll over the time chunk (t_chunk is a compile-time constant),
    # so every gx_ref[t] / out_ref[t] access has a static index.
    for t in range(t_chunk):
        gates = gx_ref[t] + jnp.dot(
            h_scr[...].astype(jnp.bfloat16), whh,
            preferred_element_type=jnp.float32)              # (B_pad, 4*H_pad) f32

        # Each gate block is a lane-aligned (B_pad, H_pad) slab (H_pad % 128 == 0).
        i_g = jax.nn.sigmoid(gates[:, 0 * Hp:1 * Hp])
        f_g = jax.nn.sigmoid(gates[:, 1 * Hp:2 * Hp])
        g_g = jnp.tanh(gates[:, 2 * Hp:3 * Hp])
        o_g = jax.nn.sigmoid(gates[:, 3 * Hp:4 * Hp])

        c_new = f_g * c_scr[...] + i_g * g_g                 # f32 cell state
        h_new = o_g * jnp.tanh(c_new)                        # f32 hidden state

        h_scr[...] = h_new
        c_scr[...] = c_new
        out_ref[t] = h_new                                   # lane-dense (B_pad, H_pad) store


def _lstm_recurrent_pallas(gates_x, w_hh_t_bf16, hidden_pad, t_chunk):
    """gates_x: (T_pad, B_pad, 4*H_pad) f32; returns (T_pad, B_pad, H_pad) f32."""
    T_pad, B_pad, G = gates_x.shape
    H_pad = hidden_pad
    assert G == 4 * H_pad and T_pad % t_chunk == 0
    n_chunks = T_pad // t_chunk

    kernel = functools.partial(
        _lstm_recurrent_kernel, hidden_pad=H_pad, t_chunk=t_chunk)

    cost = pl.CostEstimate(
        flops=2 * T_pad * B_pad * H_pad * 4 * H_pad,
        transcendentals=5 * T_pad * B_pad * H_pad,
        bytes_accessed=(gates_x.size * 4 + w_hh_t_bf16.size * 2
                        + T_pad * B_pad * H_pad * 4),
    )

    return pl.pallas_call(
        kernel,
        out_shape=jax.ShapeDtypeStruct((T_pad, B_pad, H_pad), jnp.float32),
        grid_spec=pltpu.PrefetchScalarGridSpec(
            num_scalar_prefetch=0,
            grid=(n_chunks,),
            in_specs=[
                pl.BlockSpec((t_chunk, B_pad, G), lambda tb: (tb, 0, 0)),
                pl.BlockSpec((H_pad, G), lambda tb: (0, 0)),
            ],
            out_specs=pl.BlockSpec((t_chunk, B_pad, H_pad), lambda tb: (tb, 0, 0)),
            scratch_shapes=[
                pltpu.VMEM((B_pad, H_pad), jnp.float32),  # h carry
                pltpu.VMEM((B_pad, H_pad), jnp.float32),  # c carry
            ],
        ),
        compiler_params=pltpu.CompilerParams(
            # Time axis must remain sequential; h/c scratch is carried across it.
            dimension_semantics=("arbitrary",),
        ),
        cost_estimate=cost,
    )(gates_x, w_hh_t_bf16)


# -----------------------------------------------------------------------------
# Weight / bias layout helpers (PyTorch -> lane-aligned padded layout).
# -----------------------------------------------------------------------------
def _pad_gate_weight(w, hidden, hidden_pad, in_dim_pad):
    """w: (4H, in_real) PyTorch layout -> (in_dim_pad, 4*H_pad) transposed,
    with each gate's H columns placed at the start of a lane-aligned H_pad block."""
    in_real = w.shape[1]
    w_t = jnp.transpose(w).reshape(in_real, 4, hidden)
    w_t = jnp.pad(w_t, ((0, in_dim_pad - in_real), (0, 0),
                        (0, hidden_pad - hidden)))
    return w_t.reshape(in_dim_pad, 4 * hidden_pad)


def _pad_gate_bias(b, hidden, hidden_pad):
    """b: (4H,) -> (1, 4*H_pad) with zero padding inside each gate block."""
    b = b.reshape(4, hidden)
    b = jnp.pad(b, ((0, 0), (0, hidden_pad - hidden)))
    return b.reshape(1, 4 * hidden_pad)


# -----------------------------------------------------------------------------
# Stacked LSTM forward.
# -----------------------------------------------------------------------------
def simple_lstm_forward(x, params, *, t_chunk=8):
    """x: (T, B, input_size) f32 -> (T, B, hidden_size) f32 (zero init state)."""
    T, B, _ = x.shape
    H = params[0][1].shape[1]

    H_pad = _round_up(H, LANE)
    B_pad = _round_up(B, SUBLANE)
    T_pad = _round_up(T, t_chunk)

    # Pad batch / time once; padded rows are independent and sliced off at the end.
    cur = jnp.pad(x, ((0, T_pad - T), (0, B_pad - B), (0, 0)))

    for (w_ih, w_hh, b_ih, b_hh) in params:
        in_dim = cur.shape[-1]
        w_ih_t = _pad_gate_weight(w_ih, H, H_pad, in_dim).astype(jnp.bfloat16)
        w_hh_t = _pad_gate_weight(w_hh, H, H_pad, H_pad).astype(jnp.bfloat16)
        bias = _pad_gate_bias(b_ih + b_hh, H, H_pad)  # f32, folded into gates_x

        # Time-parallel input projection as ONE large bf16 GEMM (f32 accumulate).
        gates_x = jnp.dot(
            cur.reshape(T_pad * B_pad, in_dim).astype(jnp.bfloat16), w_ih_t,
            preferred_element_type=jnp.float32,
        ).reshape(T_pad, B_pad, 4 * H_pad) + bias

        # Sequential recurrence in Pallas.
        cur = _lstm_recurrent_pallas(gates_x, w_hh_t, H_pad, t_chunk)
        # TODO(synk): for v7x, shard B_pad across the 2 TensorCores with a leading
        # "parallel" batch-block grid axis (per-core h/c scratch); no-op on v5e/v6e.

    return cur[:T, :B, :H]


# -----------------------------------------------------------------------------
# Params + pure-JAX reference (PyTorch nn.LSTM semantics, full f32).
# -----------------------------------------------------------------------------
def init_lstm_params(key, input_size, hidden_size, num_layers):
    params = []
    bound = 1.0 / (hidden_size ** 0.5)
    for layer in range(num_layers):
        in_sz = input_size if layer == 0 else hidden_size
        key, k1, k2, k3, k4 = jax.random.split(key, 5)
        w_ih = jax.random.uniform(k1, (4 * hidden_size, in_sz),
                                  jnp.float32, -bound, bound)
        w_hh = jax.random.uniform(k2, (4 * hidden_size, hidden_size),
                                  jnp.float32, -bound, bound)
        b_ih = jax.random.uniform(k3, (4 * hidden_size,),
                                  jnp.float32, -bound, bound)
        b_hh = jax.random.uniform(k4, (4 * hidden_size,),
                                  jnp.float32, -bound, bound)
        params.append((w_ih, w_hh, b_ih, b_hh))
    return params


def simple_lstm_reference(x, params):
    out = x
    for (w_ih, w_hh, b_ih, b_hh) in params:
        H = w_hh.shape[1]
        B = out.shape[1]

        def step(carry, x_t):
            h, c = carry
            gates = x_t @ w_ih.T + b_ih + h @ w_hh.T + b_hh
            i = jax.nn.sigmoid(gates[:, 0 * H:1 * H])
            f = jax.nn.sigmoid(gates[:, 1 * H:2 * H])
            g = jnp.tanh(gates[:, 2 * H:3 * H])
            o = jax.nn.sigmoid(gates[:, 3 * H:4 * H])
            c_new = f * c + i * g
            h_new = o * jnp.tanh(c_new)
            return (h_new, c_new), h_new

        init = (jnp.zeros((B, H), jnp.float32), jnp.zeros((B, H), jnp.float32))
        _, out = jax.lax.scan(step, init, out)
    return out


if __name__ == "__main__":
    # Shapes consistent with nn.LSTM(batch_first=False): x is (seq, batch, input).
    T, B = 8, 2
    input_size, hidden_size, num_layers = 16, 32, 2

    key = jax.random.PRNGKey(0)
    key, kx = jax.random.split(key)
    x = jax.random.normal(kx, (T, B, input_size), dtype=jnp.float32)

    params = init_lstm_params(key, input_size, hidden_size, num_layers)

    out = simple_lstm_forward(x, params)
    out = jax.block_until_ready(out)

    ref = simple_lstm_reference(x, params)
    assert out.shape == (T, B, hidden_size)
    # Matmul operands are bf16 (f32 accumulation/state), so allow bf16-level error
    # vs. the full-f32 reference.
    err = jnp.max(jnp.abs(out - ref))
    assert err < 2e-2, f"mismatch vs reference, max abs err = {err}"

    print("KERNEL_OK")
</pallas_src>

<mosaic_0001>
module attributes {stable_mosaic.version = 11 : i64} {
  func.func @_lstm_recurrent_kernel(%arg0: i32, %arg1: memref<8x8x512xf32, #tpu.memory_space<vmem>>, %arg2: memref<128x512xbf16, #tpu.memory_space<vmem>>, %arg3: memref<8x8x128xf32, #tpu.memory_space<vmem>>, %arg4: memref<8x128xf32, #tpu.memory_space<vmem>>, %arg5: memref<8x128xf32, #tpu.memory_space<vmem>>) attributes {dimension_semantics = [#tpu.dimension_semantics<arbitrary>], iteration_bounds = array<i64: 1>, scalar_prefetch = 0 : i64, scratch_operands = 2 : i64, tpu.core_type = #tpu.core_type<tc>, window_params = [{transform_indices = @transform_0, window_bounds = array<i64: 8, 8, 512>}, {pipeline_mode = #tpu.pipeline_mode<synchronous>, transform_indices = @transform_1, window_bounds = array<i64: 128, 512>}, {transform_indices = @transform_2, window_bounds = array<i64: 8, 8, 128>}]} {
    %c0_i32 = arith.constant 0 : i32
    %0 = arith.cmpi eq, %arg0, %c0_i32 : i32
    %1 = arith.extui %0 : i1 to i32
    %c0_i32_0 = arith.constant 0 : i32
    %2 = arith.cmpi ne, %1, %c0_i32_0 : i32
    scf.if %2 {
      %cst_138 = arith.constant 0.000000e+00 : f32
      %300 = vector.broadcast %cst_138 : f32 to vector<8x128xf32>
      %c0_139 = arith.constant 0 : index
      %c0_140 = arith.constant 0 : index
      %301 = vector.load %arg4[%c0_139, %c0_140] : memref<8x128xf32, #tpu.memory_space<vmem>>, vector<8x128xf32>
      tpu.vector_store %arg4[%c0_139, %c0_140], %300 {strides = array<i32>} : memref<8x128xf32, #tpu.memory_space<vmem>>, vector<8x128xf32>,
      %cst_141 = arith.constant 0.000000e+00 : f32
      %302 = vector.broadcast %cst_141 : f32 to vector<8x128xf32>
      %c0_142 = arith.constant 0 : index
      %c0_143 = arith.constant 0 : index
      %303 = vector.load %arg5[%c0_142, %c0_143] : memref<8x128xf32, #tpu.memory_space<vmem>>, vector<8x128xf32>
      tpu.vector_store %arg5[%c0_142, %c0_143], %302 {strides = array<i32>} : memref<8x128xf32, #tpu.memory_space<vmem>>, vector<8x128xf32>,
    } else {
    }
    %c0 = arith.constant 0 : index
    %c0_1 = arith.constant 0 : index
    %3 = vector.load %arg2[%c0, %c0_1] : memref<128x512xbf16, #tpu.memory_space<vmem>>, vector<128x512xbf16>
    %c0_2 = arith.constant 0 : index
    %c0_3 = arith.constant 0 : index
    %c0_4 = arith.constant 0 : index
    %4 = vector.load %arg1[%c0_2, %c0_3, %c0_4] : memref<8x8x512xf32, #tpu.memory_space<vmem>>, vector<1x8x512xf32>
    %5 = vector.shape_cast %4 : vector<1x8x512xf32> to vector<8x512xf32>
    %c0_5 = arith.constant 0 : index
    %c0_6 = arith.constant 0 : index
    %6 = vector.load %arg4[%c0_5, %c0_6] : memref<8x128xf32, #tpu.memory_space<vmem>>, vector<8x128xf32>
    %7 = arith.truncf %6 : vector<8x128xf32> to vector<8x128xbf16>
    %cst = arith.constant dense<0.000000e+00> : vector<8x512xf32>
    %8 = tpu.matmul %7, %3, %cst {dimension_numbers = #tpu.dot_dimension_numbers<[1], [0], [0], [1], [0, 0, 1, 1], [], []>} : vector<8x128xbf16>, vector<128x512xbf16>, vector<8x512xf32> -> vector<8x512xf32>
    %9 = arith.addf %5, %8 : vector<8x512xf32>
    %10 = vector.extract_strided_slice %9 {offsets = [0, 0], sizes = [8, 128], strides = [1, 1]} : vector<8x512xf32> to vector<8x128xf32>
    %11 = arith.negf %10 : vector<8x128xf32>
    %12 = math.exp %11 : vector<8x128xf32>
    %cst_7 = arith.constant 1.000000e+00 : f32
    %13 = vector.broadcast %cst_7 : f32 to vector<8x128xf32>
    %14 = arith.addf %13, %12 : vector<8x128xf32>
    %15 = arith.divf %13, %14 : vector<8x128xf32>
    %16 = vector.extract_strided_slice %9 {offsets = [0, 128], sizes = [8, 128], strides = [1, 1]} : vector<8x512xf32> to vector<8x128xf32>
    %17 = arith.negf %16 : vector<8x128xf32>
    %18 = math.exp %17 : vector<8x128xf32>
    %cst_8 = arith.constant 1.000000e+00 : f32
    %19 = vector.broadcast %cst_8 : f32 to vector<8x128xf32>
    %20 = arith.addf %19, %18 : vector<8x128xf32>
    %21 = arith.divf %19, %20 : vector<8x128xf32>
    %22 = vector.extract_strided_slice %9 {offsets = [0, 256], sizes = [8, 128], strides = [1, 1]} : vector<8x512xf32> to vector<8x128xf32>
    %23 = math.tanh %22 : vector<8x128xf32>
    %24 = vector.extract_strided_slice %9 {offsets = [0, 384], sizes = [8, 128], strides = [1, 1]} : vector<8x512xf32> to vector<8x128xf32>
    %25 = arith.negf %24 : vector<8x128xf32>
    %26 = math.exp %25 : vector<8x128xf32>
    %cst_9 = arith.constant 1.000000e+00 : f32
    %27 = vector.broadcast %cst_9 : f32 to vector<8x128xf32>
    %28 = arith.addf %27, %26 : vector<8x128xf32>
    %29 = arith.divf %27, %28 : vector<8x128xf32>
    %c0_10 = arith.constant 0 : index
    %c0_11 = arith.constant 0 : index
    %30 = vector.load %arg5[%c0_10, %c0_11] : memref<8x128xf32, #tpu.memory_space<vmem>>, vector<8x128xf32>
    %31 = arith.mulf %21, %30 : vector<8x128xf32>
    %32 = arith.mulf %15, %23 : vector<8x128xf32>
    %33 = arith.addf %31, %32 : vector<8x128xf32>
    %34 = math.tanh %33 : vector<8x128xf32>
    %35 = arith.mulf %29, %34 : vector<8x128xf32>
    %c0_12 = arith.constant 0 : index
    %c0_13 = arith.constant 0 : index
    %36 = vector.load %arg4[%c0_12, %c0_13] : memref<8x128xf32, #tpu.memory_space<vmem>>, vector<8x128xf32>
    tpu.vector_store %arg4[%c0_12, %c0_13], %35 {strides = array<i32>} : memref<8x128xf32, #tpu.memory_space<vmem>>, vector<8x128xf32>,
    %c0_14 = arith.constant 0 : index
    %c0_15 = arith.constant 0 : index
    %37 = vector.load %arg5[%c0_14, %c0_15] : memref<8x128xf32, #tpu.memory_space<vmem>>, vector<8x128xf32>
    tpu.vector_store %arg5[%c0_14, %c0_15], %33 {strides = array<i32>} : memref<8x128xf32, #tpu.memory_space<vmem>>, vector<8x128xf32>,
    %c0_16 = arith.constant 0 : index
    %c0_17 = arith.constant 0 : index
    %c0_18 = arith.constant 0 : index
    %38 = vector.load %arg3[%c0_16, %c0_17, %c0_18] : memref<8x8x128xf32, #tpu.memory_space<vmem>>, vector<1x8x128xf32>
    %39 = vector.shape_cast %38 : vector<1x8x128xf32> to vector<8x128xf32>
    %40 = vector.shape_cast %35 : vector<8x128xf32> to vector<1x8x128xf32>
    tpu.vector_store %arg3[%c0_16, %c0_17, %c0_18], %40 {strides = array<i32>} : memref<8x8x128xf32, #tpu.memory_space<vmem>>, vector<1x8x128xf32>,
    %c1 = arith.constant 1 : index
    %c0_19 = arith.constant 0 : index
    %c0_20 = arith.constant 0 : index
    %41 = vector.load %arg1[%c1, %c0_19, %c0_20] : memref<8x8x512xf32, #tpu.memory_space<vmem>>, vector<1x8x512xf32>
    %42 = vector.shape_cast %41 : vector<1x8x512xf32> to vector<8x512xf32>
    %c0_21 = arith.constant 0 : index
    %c0_22 = arith.constant 0 : index
    %43 = vector.load %arg4[%c0_21, %c0_22] : memref<8x128xf32, #tpu.memory_space<vmem>>, vector<8x128xf32>
    %44 = arith.truncf %43 : vector<8x128xf32> to vector<8x128xbf16>
    %cst_23 = arith.constant dense<0.000000e+00> : vector<8x512xf32>
    %45 = tpu.matmul %44, %3, %cst_23 {dimension_numbers = #tpu.dot_dimension_numbers<[1], [0], [0], [1], [0, 0, 1, 1], [], []>} : vector<8x128xbf16>, vector<128x512xbf16>, vector<8x512xf32> -> vector<8x512xf32>
    %46 = arith.addf %42, %45 : vector<8x512xf32>
    %47 = vector.extract_strided_slice %46 {offsets = [0, 0], sizes = [8, 128], strides = [1, 1]} : vector<8x512xf32> to vector<8x128xf32>
    %48 = arith.negf %47 : vector<8x128xf32>
    %49 = math.exp %48 : vector<8x128xf32>
    %cst_24 = arith.constant 1.000000e+00 : f32
    %50 = vector.broadcast %cst_24 : f32 to vector<8x128xf32>
    %51 = arith.addf %50, %49 : vector<8x128xf32>
    %52 = arith.divf %50, %51 : vector<8x128xf32>
    %53 = vector.extract_strided_slice %46 {offsets = [0, 128], sizes = [8, 128], strides = [1, 1]} : vector<8x512xf32> to vector<8x128xf32>
    %54 = arith.negf %53 : vector<8x128xf32>
    %55 = math.exp %54 : vector<8x128xf32>
    %cst_25 = arith.constant 1.000000e+00 : f32
    %56 = vector.broadcast %cst_25 : f32 to vector<8x128xf32>
    %57 = arith.addf %56, %55 : vector<8x128xf32>
    %58 = arith.divf %56, %57 : vector<8x128xf32>
    %59 = vector.extract_strided_slice %46 {offsets = [0, 256], sizes = [8, 128], strides = [1, 1]} : vector<8x512xf32> to vector<8x128xf32>
    %60 = math.tanh %59 : vector<8x128xf32>
    %61 = vector.extract_strided_slice %46 {offsets = [0, 384], sizes = [8, 128], strides = [1, 1]} : vector<8x512xf32> to vector<8x128xf32>
    %62 = arith.negf %61 : vector<8x128xf32>
    %63 = math.exp %62 : vector<8x128xf32>
    %cst_26 = arith.constant 1.000000e+00 : f32
    %64 = vector.broadcast %cst_26 : f32 to vector<8x128xf32>
    %65 = arith.addf %64, %63 : vector<8x128xf32>
    %66 = arith.divf %64, %65 : vector<8x128xf32>
    %c0_27 = arith.constant 0 : index
    %c0_28 = arith.constant 0 : index
    %67 = vector.load %arg5[%c0_27, %c0_28] : memref<8x128xf32, #tpu.memory_space<vmem>>, vector<8x128xf32>
    %68 = arith.mulf %58, %67 : vector<8x128xf32>
    %69 = arith.mulf %52, %60 : vector<8x128xf32>
    %70 = arith.addf %68, %69 : vector<8x128xf32>
    %71 = math.tanh %70 : vector<8x128xf32>
    %72 = arith.mulf %66, %71 : vector<8x128xf32>
    %c0_29 = arith.constant 0 : index
    %c0_30 = arith.constant 0 : index
    %73 = vector.load %arg4[%c0_29, %c0_30] : memref<8x128xf32, #tpu.memory_space<vmem>>, vector<8x128xf32>
    tpu.vector_store %arg4[%c0_29, %c0_30], %72 {strides = array<i32>} : memref<8x128xf32, #tpu.memory_space<vmem>>, vector<8x128xf32>,
    %c0_31 = arith.constant 0 : index
    %c0_32 = arith.constant 0 : index
    %74 = vector.load %arg5[%c0_31, %c0_32] : memref<8x128xf32, #tpu.memory_space<vmem>>, vector<8x128xf32>
    tpu.vector_store %arg5[%c0_31, %c0_32], %70 {strides = array<i32>} : memref<8x128xf32, #tpu.memory_space<vmem>>, vector<8x128xf32>,
    %c1_33 = arith.constant 1 : index
    %c0_34 = arith.constant 0 : index
    %c0_35 = arith.constant 0 : index
    %75 = vector.load %arg3[%c1_33, %c0_34, %c0_35] : memref<8x8x128xf32, #tpu.memory_space<vmem>>, vector<1x8x128xf32>
    %76 = vector.shape_cast %75 : vector<1x8x128xf32> to vector<8x128xf32>
    %77 = vector.shape_cast %72 : vector<8x128xf32> to vector<1x8x128xf32>
    tpu.vector_store %arg3[%c1_33, %c0_34, %c0_35], %77 {strides = array<i32>} : memref<8x8x128xf32, #tpu.memory_space<vmem>>, vector<1x8x128xf32>,
    %c2 = arith.constant 2 : index
    %c0_36 = arith.constant 0 : index
    %c0_37 = arith.constant 0 : index
    %78 = vector.load %arg1[%c2, %c0_36, %c0_37] : memref<8x8x512xf32, #tpu.memory_space<vmem>>, vector<1x8x512xf32>
    %79 = vector.shape_cast %78 : vector<1x8x512xf32> to vector<8x512xf32>
    %c0_38 = arith.constant 0 : index
    %c0_39 = arith.constant 0 : index
    %80 = vector.load %arg4[%c0_38, %c0_39] : memref<8x128xf32, #tpu.memory_space<vmem>>, vector<8x128xf32>
    %81 = arith.truncf %80 : vector<8x128xf32> to vector<8x128xbf16>
    %cst_40 = arith.constant dense<0.000000e+00> : vector<8x512xf32>
    %82 = tpu.matmul %81, %3, %cst_40 {dimension_numbers = #tpu.dot_dimension_numbers<[1], [0], [0], [1], [0, 0, 1, 1], [], []>} : vector<8x128xbf16>, vector<128x512xbf16>, vector<8x512xf32> -> vector<8x512xf32>
    %83 = arith.addf %79, %82 : vector<8x512xf32>
    %84 = vector.extract_strided_slice %83 {offsets = [0, 0], sizes = [8, 128], strides = [1, 1]} : vector<8x512xf32> to vector<8x128xf32>
    %85 = arith.negf %84 : vector<8x128xf32>
    %86 = math.exp %85 : vector<8x128xf32>
    %cst_41 = arith.constant 1.000000e+00 : f32
    %87 = vector.broadcast %cst_41 : f32 to vector<8x128xf32>
    %88 = arith.addf %87, %86 : vector<8x128xf32>
    %89 = arith.divf %87, %88 : vector<8x128xf32>
    %90 = vector.extract_strided_slice %83 {offsets = [0, 128], sizes = [8, 128], strides = [1, 1]} : vector<8x512xf32> to vector<8x128xf32>
    %91 = arith.negf %90 : vector<8x128xf32>
    %92 = math.exp %91 : vector<8x128xf32>
    %cst_42 = arith.constant 1.000000e+00 : f32
    %93 = vector.broadcast %cst_42 : f32 to vector<8x128xf32>
    %94 = arith.addf %93, %92 : vector<8x128xf32>
    %95 = arith.divf %93, %94 : vector<8x128xf32>
    %96 = vector.extract_strided_slice %83 {offsets = [0, 256], sizes = [8, 128], strides = [1, 1]} : vector<8x512xf32> to vector<8x128xf32>
    %97 = math.tanh %96 : vector<8x128xf32>
    %98 = vector.extract_strided_slice %83 {offsets = [0, 384], sizes = [8, 128], strides = [1, 1]} : vector<8x512xf32> to vector<8x128xf32>
    %99 = arith.negf %98 : vector<8x128xf32>
    %100 = math.exp %99 : vector<8x128xf32>
    %cst_43 = arith.constant 1.000000e+00 : f32
    %101 = vector.broadcast %cst_43 : f32 to vector<8x128xf32>
    %102 = arith.addf %101, %100 : vector<8x128xf32>
    %103 = arith.divf %101, %102 : vector<8x128xf32>
    %c0_44 = arith.constant 0 : index
    %c0_45 = arith.constant 0 : index
    %104 = vector.load %arg5[%c0_44, %c0_45] : memref<8x128xf32, #tpu.memory_space<vmem>>, vector<8x128xf32>
    %105 = arith.mulf %95, %104 : vector<8x128xf32>
    %106 = arith.mulf %89, %97 : vector<8x128xf32>
    %107 = arith.addf %105, %106 : vector<8x128xf32>
    %108 = math.tanh %107 : vector<8x128xf32>
    %109 = arith.mulf %103, %108 : vector<8x128xf32>
    %c0_46 = arith.constant 0 : index
    %c0_47 = arith.constant 0 : index
    %110 = vector.load %arg4[%c0_46, %c0_47] : memref<8x128xf32, #tpu.memory_space<vmem>>, vector<8x128xf32>
    tpu.vector_store %arg4[%c0_46, %c0_47], %109 {strides = array<i32>} : memref<8x128xf32, #tpu.memory_space<vmem>>, vector<8x128xf32>,
    %c0_48 = arith.constant 0 : index
    %c0_49 = arith.constant 0 : index
    %111 = vector.load %arg5[%c0_48, %c0_49] : memref<8x128xf32, #tpu.memory_space<vmem>>, vector<8x128xf32>
    tpu.vector_store %arg5[%c0_48, %c0_49], %107 {strides = array<i32>} : memref<8x128xf32, #tpu.memory_space<vmem>>, vector<8x128xf32>,
    %c2_50 = arith.constant 2 : index
    %c0_51 = arith.constant 0 : index
    %c0_52 = arith.constant 0 : index
    %112 = vector.load %arg3[%c2_50, %c0_51, %c0_52] : memref<8x8x128xf32, #tpu.memory_space<vmem>>, vector<1x8x128xf32>
    %113 = vector.shape_cast %112 : vector<1x8x128xf32> to vector<8x128xf32>
    %114 = vector.shape_cast %109 : vector<8x128xf32> to vector<1x8x128xf32>
    tpu.vector_store %arg3[%c2_50, %c0_51, %c0_52], %114 {strides = array<i32>} : memref<8x8x128xf32, #tpu.memory_space<vmem>>, vector<1x8x128xf32>,
    %c3 = arith.constant 3 : index
    %c0_53 = arith.constant 0 : index
    %c0_54 = arith.constant 0 : index
    %115 = vector.load %arg1[%c3, %c0_53, %c0_54] : memref<8x8x512xf32, #tpu.memory_space<vmem>>, vector<1x8x512xf32>
    %116 = vector.shape_cast %115 : vector<1x8x512xf32> to vector<8x512xf32>
    %c0_55 = arith.constant 0 : index
    %c0_56 = arith.constant 0 : index
    %117 = vector.load %arg4[%c0_55, %c0_56] : memref<8x128xf32, #tpu.memory_space<vmem>>, vector<8x128xf32>
    %118 = arith.truncf %117 : vector<8x128xf32> to vector<8x128xbf16>
    %cst_57 = arith.constant dense<0.000000e+00> : vector<8x512xf32>
    %119 = tpu.matmul %118, %3, %cst_57 {dimension_numbers = #tpu.dot_dimension_numbers<[1], [0], [0], [1], [0, 0, 1, 1], [], []>} : vector<8x128xbf16>, vector<128x512xbf16>, vector<8x512xf32> -> vector<8x512xf32>
    %120 = arith.addf %116, %119 : vector<8x512xf32>
    %121 = vector.extract_strided_slice %120 {offsets = [0, 0], sizes = [8, 128], strides = [1, 1]} : vector<8x512xf32> to vector<8x128xf32>
    %122 = arith.negf %121 : vector<8x128xf32>
    %123 = math.exp %122 : vector<8x128xf32>
    %cst_58 = arith.constant 1.000000e+00 : f32
    %124 = vector.broadcast %cst_58 : f32 to vector<8x128xf32>
    %125 = arith.addf %124, %123 : vector<8x128xf32>
    %126 = arith.divf %124, %125 : vector<8x128xf32>
    %127 = vector.extract_strided_slice %120 {offsets = [0, 128], sizes = [8, 128], strides = [1, 1]} : vector<8x512xf32> to vector<8x128xf32>
    %128 = arith.negf %127 : vector<8x128xf32>
    %129 = math.exp %128 : vector<8x128xf32>
    %cst_59 = arith.constant 1.000000e+00 : f32
    %130 = vector.broadcast %cst_59 : f32 to vector<8x128xf32>
    %131 = arith.addf %130, %129 : vector<8x128xf32>
    %132 = arith.divf %130, %131 : vector<8x128xf32>
    %133 = vector.extract_strided_slice %120 {offsets = [0, 256], sizes = [8, 128], strides = [1, 1]} : vector<8x512xf32> to vector<8x128xf32>
    %134 = math.tanh %133 : vector<8x128xf32>
    %135 = vector.extract_strided_slice %120 {offsets = [0, 384], sizes = [8, 128], strides = [1, 1]} : vector<8x512xf32> to vector<8x128xf32>
    %136 = arith.negf %135 : vector<8x128xf32>
    %137 = math.exp %136 : vector<8x128xf32>
    %cst_60 = arith.constant 1.000000e+00 : f32
    %138 = vector.broadcast %cst_60 : f32 to vector<8x128xf32>
    %139 = arith.addf %138, %137 : vector<8x128xf32>
    %140 = arith.divf %138, %139 : vector<8x128xf32>
    %c0_61 = arith.constant 0 : index
    %c0_62 = arith.constant 0 : index
    %141 = vector.load %arg5[%c0_61, %c0_62] : memref<8x128xf32, #tpu.memory_space<vmem>>, vector<8x128xf32>
    %142 = arith.mulf %132, %141 : vector<8x128xf32>
    %143 = arith.mulf %126, %134 : vector<8x128xf32>
    %144 = arith.addf %142, %143 : vector<8x128xf32>
    %145 = math.tanh %144 : vector<8x128xf32>
    %146 = arith.mulf %140, %145 : vector<8x128xf32>
    %c0_63 = arith.constant 0 : index
    %c0_64 = arith.constant 0 : index
    %147 = vector.load %arg4[%c0_63, %c0_64] : memref<8x128xf32, #tpu.memory_space<vmem>>, vector<8x128xf32>
    tpu.vector_store %arg4[%c0_63, %c0_64], %146 {strides = array<i32>} : memref<8x128xf32, #tpu.memory_space<vmem>>, vector<8x128xf32>,
    %c0_65 = arith.constant 0 : index
    %c0_66 = arith.constant 0 : index
    %148 = vector.load %arg5[%c0_65, %c0_66] : memref<8x128xf32, #tpu.memory_space<vmem>>, vector<8x128xf32>
    tpu.vector_store %arg5[%c0_65, %c0_66], %144 {strides = array<i32>} : memref<8x128xf32, #tpu.memory_space<vmem>>, vector<8x128xf32>,
    %c3_67 = arith.constant 3 : index
    %c0_68 = arith.constant 0 : index
    %c0_69 = arith.constant 0 : index
    %149 = vector.load %arg3[%c3_67, %c0_68, %c0_69] : memref<8x8x128xf32, #tpu.memory_space<vmem>>, vector<1x8x128xf32>
    %150 = vector.shape_cast %149 : vector<1x8x128xf32> to vector<8x128xf32>
    %151 = vector.shape_cast %146 : vector<8x128xf32> to vector<1x8x128xf32>
    tpu.vector_store %arg3[%c3_67, %c0_68, %c0_69], %151 {strides = array<i32>} : memref<8x8x128xf32, #tpu.memory_space<vmem>>, vector<1x8x128xf32>,
    %c4 = arith.constant 4 : index
    %c0_70 = arith.constant 0 : index
    %c0_71 = arith.constant 0 : index
    %152 = vector.load %arg1[%c4, %c0_70, %c0_71] : memref<8x8x512xf32, #tpu.memory_space<vmem>>, vector<1x8x512xf32>
    %153 = vector.shape_cast %152 : vector<1x8x512xf32> to vector<8x512xf32>
    %c0_72 = arith.constant 0 : index
    %c0_73 = arith.constant 0 : index
    %154 = vector.load %arg4[%c0_72, %c0_73] : memref<8x128xf32, #tpu.memory_space<vmem>>, vector<8x128xf32>
    %155 = arith.truncf %154 : vector<8x128xf32> to vector<8x128xbf16>
    %cst_74 = arith.constant dense<0.000000e+00> : vector<8x512xf32>
    %156 = tpu.matmul %155, %3, %cst_74 {dimension_numbers = #tpu.dot_dimension_numbers<[1], [0], [0], [1], [0, 0, 1, 1], [], []>} : vector<8x128xbf16>, vector<128x512xbf16>, vector<8x512xf32> -> vector<8x512xf32>
    %157 = arith.addf %153, %156 : vector<8x512xf32>
    %158 = vector.extract_strided_slice %157 {offsets = [0, 0], sizes = [8, 128], strides = [1, 1]} : vector<8x512xf32> to vector<8x128xf32>
    %159 = arith.negf %158 : vector<8x128xf32>
    %160 = math.exp %159 : vector<8x128xf32>
    %cst_75 = arith.constant 1.000000e+00 : f32
    %161 = vector.broadcast %cst_75 : f32 to vector<8x128xf32>
    %162 = arith.addf %161, %160 : vector<8x128xf32>
    %163 = arith.divf %161, %162 : vector<8x128xf32>
    %164 = vector.extract_strided_slice %157 {offsets = [0, 128], sizes = [8, 128], strides = [1, 1]} : vector<8x512xf32> to vector<8x128xf32>
    %165 = arith.negf %164 : vector<8x128xf32>
    %166 = math.exp %165 : vector<8x128xf32>
    %cst_76 = arith.constant 1.000000e+00 : f32
    %167 = vector.broadcast %cst_76 : f32 to vector<8x128xf32>
    %168 = arith.addf %167, %166 : vector<8x128xf32>
    %169 = arith.divf %167, %168 : vector<8x128xf32>
    %170 = vector.extract_strided_slice %157 {offsets = [0, 256], sizes = [8, 128], strides = [1, 1]} : vector<8x512xf32> to vector<8x128xf32>
    %171 = math.tanh %170 : vector<8x128xf32>
    %172 = vector.extract_strided_slice %157 {offsets = [0, 384], sizes = [8, 128], strides = [1, 1]} : vector<8x512xf32> to vector<8x128xf32>
    %173 = arith.negf %172 : vector<8x128xf32>
    %174 = math.exp %173 : vector<8x128xf32>
    %cst_77 = arith.constant 1.000000e+00 : f32
    %175 = vector.broadcast %cst_77 : f32 to vector<8x128xf32>
    %176 = arith.addf %175, %174 : vector<8x128xf32>
    %177 = arith.divf %175, %176 : vector<8x128xf32>
    %c0_78 = arith.constant 0 : index
    %c0_79 = arith.constant 0 : index
    %178 = vector.load %arg5[%c0_78, %c0_79] : memref<8x128xf32, #tpu.memory_space<vmem>>, vector<8x128xf32>
    %179 = arith.mulf %169, %178 : vector<8x128xf32>
    %180 = arith.mulf %163, %171 : vector<8x128xf32>
    %181 = arith.addf %179, %180 : vector<8x128xf32>
    %182 = math.tanh %181 : vector<8x128xf32>
    %183 = arith.mulf %177, %182 : vector<8x128xf32>
    %c0_80 = arith.constant 0 : index
    %c0_81 = arith.constant 0 : index
    %184 = vector.load %arg4[%c0_80, %c0_81] : memref<8x128xf32, #tpu.memory_space<vmem>>, vector<8x128xf32>
    tpu.vector_store %arg4[%c0_80, %c0_81], %183 {strides = array<i32>} : memref<8x128xf32, #tpu.memory_space<vmem>>, vector<8x128xf32>,
    %c0_82 = arith.constant 0 : index
    %c0_83 = arith.constant 0 : index
    %185 = vector.load %arg5[%c0_82, %c0_83] : memref<8x128xf32, #tpu.memory_space<vmem>>, vector<8x128xf32>
    tpu.vector_store %arg5[%c0_82, %c0_83], %181 {strides = array<i32>} : memref<8x128xf32, #tpu.memory_space<vmem>>, vector<8x128xf32>,
    %c4_84 = arith.constant 4 : index
    %c0_85 = arith.constant 0 : index
    %c0_86 = arith.constant 0 : index
    %186 = vector.load %arg3[%c4_84, %c0_85, %c0_86] : memref<8x8x128xf32, #tpu.memory_space<vmem>>, vector<1x8x128xf32>
    %187 = vector.shape_cast %186 : vector<1x8x128xf32> to vector<8x128xf32>
    %188 = vector.shape_cast %183 : vector<8x128xf32> to vector<1x8x128xf32>
    tpu.vector_store %arg3[%c4_84, %c0_85, %c0_86], %188 {strides = array<i32>} : memref<8x8x128xf32, #tpu.memory_space<vmem>>, vector<1x8x128xf32>,
    %c5 = arith.constant 5 : index
    %c0_87 = arith.constant 0 : index
    %c0_88 = arith.constant 0 : index
    %189 = vector.load %arg1[%c5, %c0_87, %c0_88] : memref<8x8x512xf32, #tpu.memory_space<vmem>>, vector<1x8x512xf32>
    %190 = vector.shape_cast %189 : vector<1x8x512xf32> to vector<8x512xf32>
    %c0_89 = arith.constant 0 : index
    %c0_90 = arith.constant 0 : index
    %191 = vector.load %arg4[%c0_89, %c0_90] : memref<8x128xf32, #tpu.memory_space<vmem>>, vector<8x128xf32>
    %192 = arith.truncf %191 : vector<8x128xf32> to vector<8x128xbf16>
    %cst_91 = arith.constant dense<0.000000e+00> : vector<8x512xf32>
    %193 = tpu.matmul %192, %3, %cst_91 {dimension_numbers = #tpu.dot_dimension_numbers<[1], [0], [0], [1], [0, 0, 1, 1], [], []>} : vector<8x128xbf16>, vector<128x512xbf16>, vector<8x512xf32> -> vector<8x512xf32>
    %194 = arith.addf %190, %193 : vector<8x512xf32>
    %195 = vector.extract_strided_slice %194 {offsets = [0, 0], sizes = [8, 128], strides = [1, 1]} : vector<8x512xf32> to vector<8x128xf32>
    %196 = arith.negf %195 : vector<8x128xf32>
    %197 = math.exp %196 : vector<8x128xf32>
    %cst_92 = arith.constant 1.000000e+00 : f32
    %198 = vector.broadcast %cst_92 : f32 to vector<8x128xf32>
    %199 = arith.addf %198, %197 : vector<8x128xf32>
    %200 = arith.divf %198, %199 : vector<8x128xf32>
    %201 = vector.extract_strided_slice %194 {offsets = [0, 128], sizes = [8, 128], strides = [1, 1]} : vector<8x512xf32> to vector<8x128xf32>
    %202 = arith.negf %201 : vector<8x128xf32>
    %203 = math.exp %202 : vector<8x128xf32>
    %cst_93 = arith.constant 1.000000e+00 : f32
    %204 = vector.broadcast %cst_93 : f32 to vector<8x128xf32>
    %205 = arith.addf %204, %203 : vector<8x128xf32>
    %206 = arith.divf %204, %205 : vector<8x128xf32>
    %207 = vector.extract_strided_slice %194 {offsets = [0, 256], sizes = [8, 128], strides = [1, 1]} : vector<8x512xf32> to vector<8x128xf32>
    %208 = math.tanh %207 : vector<8x128xf32>
    %209 = vector.extract_strided_slice %194 {offsets = [0, 384], sizes = [8, 128], strides = [1, 1]} : vector<8x512xf32> to vector<8x128xf32>
    %210 = arith.negf %209 : vector<8x128xf32>
    %211 = math.exp %210 : vector<8x128xf32>
    %cst_94 = arith.constant 1.000000e+00 : f32
    %212 = vector.broadcast %cst_94 : f32 to vector<8x128xf32>
    %213 = arith.addf %212, %211 : vector<8x128xf32>
    %214 = arith.divf %212, %213 : vector<8x128xf32>
    %c0_95 = arith.constant 0 : index
    %c0_96 = arith.constant 0 : index
    %215 = vector.load %arg5[%c0_95, %c0_96] : memref<8x128xf32, #tpu.memory_space<vmem>>, vector<8x128xf32>
    %216 = arith.mulf %206, %215 : vector<8x128xf32>
    %217 = arith.mulf %200, %208 : vector<8x128xf32>
    %218 = arith.addf %216, %217 : vector<8x128xf32>
    %219 = math.tanh %218 : vector<8x128xf32>
    %220 = arith.mulf %214, %219 : vector<8x128xf32>
    %c0_97 = arith.constant 0 : index
    %c0_98 = arith.constant 0 : index
    %221 = vector.load %arg4[%c0_97, %c0_98] : memref<8x128xf32, #tpu.memory_space<vmem>>, vector<8x128xf32>
    tpu.vector_store %arg4[%c0_97, %c0_98], %220 {strides = array<i32>} : memref<8x128xf32, #tpu.memory_space<vmem>>, vector<8x128xf32>,
    %c0_99 = arith.constant 0 : index
    %c0_100 = arith.constant 0 : index
    %222 = vector.load %arg5[%c0_99, %c0_100] : memref<8x128xf32, #tpu.memory_space<vmem>>, vector<8x128xf32>
    tpu.vector_store %arg5[%c0_99, %c0_100], %218 {strides = array<i32>} : memref<8x128xf32, #tpu.memory_space<vmem>>, vector<8x128xf32>,
    %c5_101 = arith.constant 5 : index
    %c0_102 = arith.constant 0 : index
    %c0_103 = arith.constant 0 : index
    %223 = vector.load %arg3[%c5_101, %c0_102, %c0_103] : memref<8x8x128xf32, #tpu.memory_space<vmem>>, vector<1x8x128xf32>
    %224 = vector.shape_cast %223 : vector<1x8x128xf32> to vector<8x128xf32>
    %225 = vector.shape_cast %220 : vector<8x128xf32> to vector<1x8x128xf32>
    tpu.vector_store %arg3[%c5_101, %c0_102, %c0_103], %225 {strides = array<i32>} : memref<8x8x128xf32, #tpu.memory_space<vmem>>, vector<1x8x128xf32>,
    %c6 = arith.constant 6 : index
    %c0_104 = arith.constant 0 : index
    %c0_105 = arith.constant 0 : index
    %226 = vector.load %arg1[%c6, %c0_104, %c0_105] : memref<8x8x512xf32, #tpu.memory_space<vmem>>, vector<1x8x512xf32>
    %227 = vector.shape_cast %226 : vector<1x8x512xf32> to vector<8x512xf32>
    %c0_106 = arith.constant 0 : index
    %c0_107 = arith.constant 0 : index
    %228 = vector.load %arg4[%c0_106, %c0_107] : memref<8x128xf32, #tpu.memory_space<vmem>>, vector<8x128xf32>
    %229 = arith.truncf %228 : vector<8x128xf32> to vector<8x128xbf16>
    %cst_108 = arith.constant dense<0.000000e+00> : vector<8x512xf32>
    %230 = tpu.matmul %229, %3, %cst_108 {dimension_numbers = #tpu.dot_dimension_numbers<[1], [0], [0], [1], [0, 0, 1, 1], [], []>} : vector<8x128xbf16>, vector<128x512xbf16>, vector<8x512xf32> -> vector<8x512xf32>
    %231 = arith.addf %227, %230 : vector<8x512xf32>
    %232 = vector.extract_strided_slice %231 {offsets = [0, 0], sizes = [8, 128], strides = [1, 1]} : vector<8x512xf32> to vector<8x128xf32>
    %233 = arith.negf %232 : vector<8x128xf32>
    %234 = math.exp %233 : vector<8x128xf32>
    %cst_109 = arith.constant 1.000000e+00 : f32
    %235 = vector.broadcast %cst_109 : f32 to vector<8x128xf32>
    %236 = arith.addf %235, %234 : vector<8x128xf32>
    %237 = arith.divf %235, %236 : vector<8x128xf32>
    %238 = vector.extract_strided_slice %231 {offsets = [0, 128], sizes = [8, 128], strides = [1, 1]} : vector<8x512xf32> to vector<8x128xf32>
    %239 = arith.negf %238 : vector<8x128xf32>
    %240 = math.exp %239 : vector<8x128xf32>
    %cst_110 = arith.constant 1.000000e+00 : f32
    %241 = vector.broadcast %cst_110 : f32 to vector<8x128xf32>
    %242 = arith.addf %241, %240 : vector<8x128xf32>
    %243 = arith.divf %241, %242 : vector<8x128xf32>
    %244 = vector.extract_strided_slice %231 {offsets = [0, 256], sizes = [8, 128], strides = [1, 1]} : vector<8x512xf32> to vector<8x128xf32>
    %245 = math.tanh %244 : vector<8x128xf32>
    %246 = vector.extract_strided_slice %231 {offsets = [0, 384], sizes = [8, 128], strides = [1, 1]} : vector<8x512xf32> to vector<8x128xf32>
    %247 = arith.negf %246 : vector<8x128xf32>
    %248 = math.exp %247 : vector<8x128xf32>
    %cst_111 = arith.constant 1.000000e+00 : f32
    %249 = vector.broadcast %cst_111 : f32 to vector<8x128xf32>
    %250 = arith.addf %249, %248 : vector<8x128xf32>
    %251 = arith.divf %249, %250 : vector<8x128xf32>
    %c0_112 = arith.constant 0 : index
    %c0_113 = arith.constant 0 : index
    %252 = vector.load %arg5[%c0_112, %c0_113] : memref<8x128xf32, #tpu.memory_space<vmem>>, vector<8x128xf32>
    %253 = arith.mulf %243, %252 : vector<8x128xf32>
    %254 = arith.mulf %237, %245 : vector<8x128xf32>
    %255 = arith.addf %253, %254 : vector<8x128xf32>
    %256 = math.tanh %255 : vector<8x128xf32>
    %257 = arith.mulf %251, %256 : vector<8x128xf32>
    %c0_114 = arith.constant 0 : index
    %c0_115 = arith.constant 0 : index
    %258 = vector.load %arg4[%c0_114, %c0_115] : memref<8x128xf32, #tpu.memory_space<vmem>>, vector<8x128xf32>
    tpu.vector_store %arg4[%c0_114, %c0_115], %257 {strides = array<i32>} : memref<8x128xf32, #tpu.memory_space<vmem>>, vector<8x128xf32>,
    %c0_116 = arith.constant 0 : index
    %c0_117 = arith.constant 0 : index
    %259 = vector.load %arg5[%c0_116, %c0_117] : memref<8x128xf32, #tpu.memory_space<vmem>>, vector<8x128xf32>
    tpu.vector_store %arg5[%c0_116, %c0_117], %255 {strides = array<i32>} : memref<8x128xf32, #tpu.memory_space<vmem>>, vector<8x128xf32>,
    %c6_118 = arith.constant 6 : index
    %c0_119 = arith.constant 0 : index
    %c0_120 = arith.constant 0 : index
    %260 = vector.load %arg3[%c6_118, %c0_119, %c0_120] : memref<8x8x128xf32, #tpu.memory_space<vmem>>, vector<1x8x128xf32>
    %261 = vector.shape_cast %260 : vector<1x8x128xf32> to vector<8x128xf32>
    %262 = vector.shape_cast %257 : vector<8x128xf32> to vector<1x8x128xf32>
    tpu.vector_store %arg3[%c6_118, %c0_119, %c0_120], %262 {strides = array<i32>} : memref<8x8x128xf32, #tpu.memory_space<vmem>>, vector<1x8x128xf32>,
    %c7 = arith.constant 7 : index
    %c0_121 = arith.constant 0 : index
    %c0_122 = arith.constant 0 : index
    %263 = vector.load %arg1[%c7, %c0_121, %c0_122] : memref<8x8x512xf32, #tpu.memory_space<vmem>>, vector<1x8x512xf32>
    %264 = vector.shape_cast %263 : vector<1x8x512xf32> to vector<8x512xf32>
    %c0_123 = arith.constant 0 : index
    %c0_124 = arith.constant 0 : index
    %265 = vector.load %arg4[%c0_123, %c0_124] : memref<8x128xf32, #tpu.memory_space<vmem>>, vector<8x128xf32>
    %266 = arith.truncf %265 : vector<8x128xf32> to vector<8x128xbf16>
    %cst_125 = arith.constant dense<0.000000e+00> : vector<8x512xf32>
    %267 = tpu.matmul %266, %3, %cst_125 {dimension_numbers = #tpu.dot_dimension_numbers<[1], [0], [0], [1], [0, 0, 1, 1], [], []>} : vector<8x128xbf16>, vector<128x512xbf16>, vector<8x512xf32> -> vector<8x512xf32>
    %268 = arith.addf %264, %267 : vector<8x512xf32>
    %269 = vector.extract_strided_slice %268 {offsets = [0, 0], sizes = [8, 128], strides = [1, 1]} : vector<8x512xf32> to vector<8x128xf32>
    %270 = arith.negf %269 : vector<8x128xf32>
    %271 = math.exp %270 : vector<8x128xf32>
    %cst_126 = arith.constant 1.000000e+00 : f32
    %272 = vector.broadcast %cst_126 : f32 to vector<8x128xf32>
    %273 = arith.addf %272, %271 : vector<8x128xf32>
    %274 = arith.divf %272, %273 : vector<8x128xf32>
    %275 = vector.extract_strided_slice %268 {offsets = [0, 128], sizes = [8, 128], strides = [1, 1]} : vector<8x512xf32> to vector<8x128xf32>
    %276 = arith.negf %275 : vector<8x128xf32>
    %277 = math.exp %276 : vector<8x128xf32>
    %cst_127 = arith.constant 1.000000e+00 : f32
    %278 = vector.broadcast %cst_127 : f32 to vector<8x128xf32>
    %279 = arith.addf %278, %277 : vector<8x128xf32>
    %280 = arith.divf %278, %279 : vector<8x128xf32>
    %281 = vector.extract_strided_slice %268 {offsets = [0, 256], sizes = [8, 128], strides = [1, 1]} : vector<8x512xf32> to vector<8x128xf32>
    %282 = math.tanh %281 : vector<8x128xf32>
    %283 = vector.extract_strided_slice %268 {offsets = [0, 384], sizes = [8, 128], strides = [1, 1]} : vector<8x512xf32> to vector<8x128xf32>
    %284 = arith.negf %283 : vector<8x128xf32>
    %285 = math.exp %284 : vector<8x128xf32>
    %cst_128 = arith.constant 1.000000e+00 : f32
    %286 = vector.broadcast %cst_128 : f32 to vector<8x128xf32>
    %287 = arith.addf %286, %285 : vector<8x128xf32>
    %288 = arith.divf %286, %287 : vector<8x128xf32>
    %c0_129 = arith.constant 0 : index
    %c0_130 = arith.constant 0 : index
    %289 = vector.load %arg5[%c0_129, %c0_130] : memref<8x128xf32, #tpu.memory_space<vmem>>, vector<8x128xf32>
    %290 = arith.mulf %280, %289 : vector<8x128xf32>
    %291 = arith.mulf %274, %282 : vector<8x128xf32>
    %292 = arith.addf %290, %291 : vector<8x128xf32>
    %293 = math.tanh %292 : vector<8x128xf32>
    %294 = arith.mulf %288, %293 : vector<8x128xf32>
    %c0_131 = arith.constant 0 : index
    %c0_132 = arith.constant 0 : index
    %295 = vector.load %arg4[%c0_131, %c0_132] : memref<8x128xf32, #tpu.memory_space<vmem>>, vector<8x128xf32>
    tpu.vector_store %arg4[%c0_131, %c0_132], %294 {strides = array<i32>} : memref<8x128xf32, #tpu.memory_space<vmem>>, vector<8x128xf32>,
    %c0_133 = arith.constant 0 : index
    %c0_134 = arith.constant 0 : index
    %296 = vector.load %arg5[%c0_133, %c0_134] : memref<8x128xf32, #tpu.memory_space<vmem>>, vector<8x128xf32>
    tpu.vector_store %arg5[%c0_133, %c0_134], %292 {strides = array<i32>} : memref<8x128xf32, #tpu.memory_space<vmem>>, vector<8x128xf32>,
    %c7_135 = arith.constant 7 : index
    %c0_136 = arith.constant 0 : index
    %c0_137 = arith.constant 0 : index
    %297 = vector.load %arg3[%c7_135, %c0_136, %c0_137] : memref<8x8x128xf32, #tpu.memory_space<vmem>>, vector<1x8x128xf32>
    %298 = vector.shape_cast %297 : vector<1x8x128xf32> to vector<8x128xf32>
    %299 = vector.shape_cast %294 : vector<8x128xf32> to vector<1x8x128xf32>
    tpu.vector_store %arg3[%c7_135, %c0_136, %c0_137], %299 {strides = array<i32>} : memref<8x8x128xf32, #tpu.memory_space<vmem>>, vector<1x8x128xf32>,
    return
  }
  func.func @transform_0(%arg0: i32) -> (i32, i32, i32) {
    %c0_i32 = arith.constant 0 : i32
    %c0_i32_0 = arith.constant 0 : i32
    %c0_i32_1 = arith.constant 0 : i32
    return %arg0, %c0_i32, %c0_i32_0 : i32, i32, i32
  }
  func.func @transform_1(%arg0: i32) -> (i32, i32) {
    %c0_i32 = arith.constant 0 : i32
    %c0_i32_0 = arith.constant 0 : i32
    %c0_i32_1 = arith.constant 0 : i32
    return %c0_i32, %c0_i32_0 : i32, i32
  }
  func.func @transform_2(%arg0: i32) -> (i32, i32, i32) {
    %c0_i32 = arith.constant 0 : i32
    %c0_i32_0 = arith.constant 0 : i32
    %c0_i32_1 = arith.constant 0 : i32
    return %arg0, %c0_i32, %c0_i32_0 : i32, i32, i32
  }
}

</mosaic_0001>

<llo_original>
// kernel: tpu_custom_call.1
$region0: #{tpu_custom_call.1}
  #allocation0 [shape = 'u32[]', space=smem, size = 0x4, offset = 0x4, fixed_abs, tag = 'smem constant byte address 0x4 - core index']
  #allocation1 [shape = 'u32[144,128]{1,0:T(1,128)}', space=vmem, size = 0x12000, scoped, tag = 'internal scratch']
  #allocation2 [shape = 'f32[8,128]{1,0:T(8,128)}', space=vmem, size = 0x1000, scoped, tag = 'scratch operand']
  #allocation3 [shape = 'f32[8,128]{1,0:T(8,128)}', space=vmem, size = 0x1000, scoped, tag = 'scratch operand']
  %s0 = inlined_call_operand.hbm [shape: f32[8,8,512], index: 0, kind: input, shape index: {}]
  %s1 = inlined_call_operand.hbm [shape: bf16[128,512], index: 1, kind: input, shape index: {}]
  %s2 = inlined_call_operand.hbm [shape: f32[8,8,128], index: 2, kind: output, shape index: {}]
  %s3 = sld [smem:[#allocation0]]
  $region30: #{tpu_custom_call.1} parent=0
    _
  %s5 = ssub.s32 1, %s3
  %s6 = scalar_select 0, %s5, %s3
  $region1: #{tpu_custom_call.1} parent=0
    #allocation4 [shape = 'u8[131072]{0}', space=vmem, size = 0x20000, scoped, tag = 'input window, operand 0, single buffered']
    #allocation5 [shape = 's32[1]{0}', space=sflag, size = 0x4, scoped, tag = 'scoped memory for tpu_custom_call.1']
    #allocation6 [shape = 's32[1]{0}', space=sflag, size = 0x4, scoped, tag = 'scoped memory for tpu_custom_call.1']
    #allocation7 [shape = 'u8[131072]{0}', space=vmem, size = 0x20000, scoped, tag = 'input window, operand 1, single buffered']
    #allocation8 [shape = 's32[1]{0}', space=sflag, size = 0x4, scoped, tag = 'scoped memory for tpu_custom_call.1']
    #allocation9 [shape = 'u8[32768]{0}', space=vmem, size = 0x8000, scoped, tag = 'output window, operand 0, single buffered']
    %7 = vsyncpa [#allocation5], 0
    %8 = vsyncpa [#allocation8], 0
    %9 = vsyncpa [#allocation6], 0
    // Predicated region
    $region2: #{tpu_custom_call.1} parent=1 // pred_check
      _
    $region3: #{tpu_custom_call.1} parent=1 // pred_check_branch
      %11 = sbr.rel (0) target = $region5
    $region4: #{tpu_custom_call.1} parent=1 // pred_region
      %s13 = ssub.s32 4096, 4096
      %14 = vsyncadd [#allocation5], %s13
      %s15 = sshll.u32 [#allocation4], 4
      %s16 = int_to_ptr.vmem [resolvable:$true] %s15
      %21 = dma.hbm_to_vmem [thread:$0]  %s0, 4096, %s16, [#allocation5], 512, 512, 32
    $region5: #{tpu_custom_call.1} parent=1 // pred_fallthru
      _
    // Predicated region
    $region6: #{tpu_custom_call.1} parent=1 // pred_check
      _
    $region7: #{tpu_custom_call.1} parent=1 // pred_check_branch
      %23 = sbr.rel (0) target = $region9
    $region8: #{tpu_custom_call.1} parent=1 // pred_region
      %s25 = ssub.s32 4096, 4096
      %26 = vsyncadd [#allocation8], %s25
      %s27 = sshll.u32 [#allocation7], 4
      %s28 = int_to_ptr.vmem [resolvable:$true] %s27
      %33 = dma.hbm_to_vmem [thread:$0]  %s1, 4096, %s28, [#allocation8], 256, 256, 16
    $region9: #{tpu_custom_call.1} parent=1 // pred_fallthru
      _
    // Predicated region
    $region10: #{tpu_custom_call.1} parent=1 // pred_check
      _
    $region11: #{tpu_custom_call.1} parent=1 // pred_check_branch
      %35 = sbr.rel (0) target = $region13
    $region12: #{tpu_custom_call.1} parent=1 // pred_region
      %36 = dma.done [#allocation5], 4096
    $region13: #{tpu_custom_call.1} parent=1 // pred_fallthru
      _
    // Predicated region
    $region14: #{tpu_custom_call.1} parent=1 // pred_check
      _
    $region15: #{tpu_custom_call.1} parent=1 // pred_check_branch
      %38 = sbr.rel (0) target = $region17
    $region16: #{tpu_custom_call.1} parent=1 // pred_region
      %39 = dma.done [#allocation8], 4096
    $region17: #{tpu_custom_call.1} parent=1 // pred_fallthru
      _
    %p41 = scmp.eq.s32.totalorder 0, 0
    // Predicated region
    $region18: #{tpu_custom_call.1} parent=1 // pred_check
      %p42 = pneg %p41
    $region19: #{tpu_custom_call.1} parent=1 // pred_check_branch
      %44 = sbr.rel (%p42) target = $region21
    $region20: #{tpu_custom_call.1} parent=1 // pred_region
      %45 = vst [vmem:[#allocation2] sm:$0xff] 0.0
      %46 = vst [vmem:[#allocation3] sm:$0xff] 0.0
    $region21: #{tpu_custom_call.1} parent=1 // pred_fallthru
      _
    %v47 = vld [vmem:[#allocation7] sm:$0xff]
    %v48 = vld [vmem:[#allocation7 + $0x8] sm:$0xff]
    %v49 = vld [vmem:[#allocation7 + $0x10] sm:$0xff]
    %v50 = vld [vmem:[#allocation7 + $0x18] sm:$0xff]
    %v51 = vld [vmem:[#allocation7 + $0x20] sm:$0xff]
    %v52 = vld [vmem:[#allocation7 + $0x28] sm:$0xff]
    %v53 = vld [vmem:[#allocation7 + $0x30] sm:$0xff]
    %v54 = vld [vmem:[#allocation7 + $0x38] sm:$0xff]
    %v55 = vld [vmem:[#allocation7 + $0x40] sm:$0xff]
    %v56 = vld [vmem:[#allocation7 + $0x48] sm:$0xff]
    %v57 = vld [vmem:[#allocation7 + $0x50] sm:$0xff]
    %v58 = vld [vmem:[#allocation7 + $0x58] sm:$0xff]
    %v59 = vld [vmem:[#allocation7 + $0x60] sm:$0xff]
    %v60 = vld [vmem:[#allocation7 + $0x68] sm:$0xff]
    %v61 = vld [vmem:[#allocation7 + $0x70] sm:$0xff]
    %v62 = vld [vmem:[#allocation7 + $0x78] sm:$0xff]
    %v63 = vld [vmem:[#allocation7 + $0x80] sm:$0xff]
    %v64 = vld [vmem:[#allocation7 + $0x88] sm:$0xff]
    %v65 = vld [vmem:[#allocation7 + $0x90] sm:$0xff]
    %v66 = vld [vmem:[#allocation7 + $0x98] sm:$0xff]
    %v67 = vld [vmem:[#allocation7 + $0xa0] sm:$0xff]
    %v68 = vld [vmem:[#allocation7 + $0xa8] sm:$0xff]
    %v69 = vld [vmem:[#allocation7 + $0xb0] sm:$0xff]
    %v70 = vld [vmem:[#allocation7 + $0xb8] sm:$0xff]
    %v71 = vld [vmem:[#allocation7 + $0xc0] sm:$0xff]
    %v72 = vld [vmem:[#allocation7 + $0xc8] sm:$0xff]
    %v73 = vld [vmem:[#allocation7 + $0xd0] sm:$0xff]
    %v74 = vld [vmem:[#allocation7 + $0xd8] sm:$0xff]
    %v75 = vld [vmem:[#allocation7 + $0xe0] sm:$0xff]
    %v76 = vld [vmem:[#allocation7 + $0xe8] sm:$0xff]
    %v77 = vld [vmem:[#allocation7 + $0xf0] sm:$0xff]
    %v78 = vld [vmem:[#allocation7 + $0xf8] sm:$0xff]
    %v79 = vld [vmem:[#allocation4] sm:$0xff]
    %v80 = vld [vmem:[#allocation4 + $0x8] sm:$0xff]
    %v81 = vld [vmem:[#allocation4 + $0x10] sm:$0xff]
    %v82 = vld [vmem:[#allocation4 + $0x18] sm:$0xff]
    %v83 = vld [vmem:[#allocation2] sm:$0xff]
    %v84 = vpack.c.bf16 %v83, %v83
    %v117 = vunpack.c.l.b16 %v47
    %v118 = vunpack.c.h.b16 %v47
    %v119 = vunpack.c.l.b16 %v48
    %v120 = vunpack.c.h.b16 %v48
    %v121 = vunpack.c.l.b16 %v49
    %v122 = vunpack.c.h.b16 %v49
    %v123 = vunpack.c.l.b16 %v50
    %v124 = vunpack.c.h.b16 %v50
    %v125 = vunpack.c.l.b16 %v51
    %v126 = vunpack.c.h.b16 %v51
    %v127 = vunpack.c.l.b16 %v52
    %v128 = vunpack.c.h.b16 %v52
    %v129 = vunpack.c.l.b16 %v53
    %v130 = vunpack.c.h.b16 %v53
    %v131 = vunpack.c.l.b16 %v54
    %v132 = vunpack.c.h.b16 %v54
    %v133 = vunpack.c.l.b16 %v55
    %v134 = vunpack.c.h.b16 %v55
    %v135 = vunpack.c.l.b16 %v56
    %v136 = vunpack.c.h.b16 %v56
    %v137 = vunpack.c.l.b16 %v57
    %v138 = vunpack.c.h.b16 %v57
    %v139 = vunpack.c.l.b16 %v58
    %v140 = vunpack.c.h.b16 %v58
    %v141 = vunpack.c.l.b16 %v59
    %v142 = vunpack.c.h.b16 %v59
    %v143 = vunpack.c.l.b16 %v60
    %v144 = vunpack.c.h.b16 %v60
    %v145 = vunpack.c.l.b16 %v61
    %v146 = vunpack.c.h.b16 %v61
    %v147 = vunpack.c.l.b16 %v62
    %v148 = vunpack.c.h.b16 %v62
    %v149 = vunpack.c.l.b16 %v63
    %v150 = vunpack.c.h.b16 %v63
    %v151 = vunpack.c.l.b16 %v64
    %v152 = vunpack.c.h.b16 %v64
    %v153 = vunpack.c.l.b16 %v65
    %v154 = vunpack.c.h.b16 %v65
    %v155 = vunpack.c.l.b16 %v66
    %v156 = vunpack.c.h.b16 %v66
    %v157 = vunpack.c.l.b16 %v67
    %v158 = vunpack.c.h.b16 %v67
    %v159 = vunpack.c.l.b16 %v68
    %v160 = vunpack.c.h.b16 %v68
    %v161 = vunpack.c.l.b16 %v69
    %v162 = vunpack.c.h.b16 %v69
    %v163 = vunpack.c.l.b16 %v70
    %v164 = vunpack.c.h.b16 %v70
    %v165 = vunpack.c.l.b16 %v71
    %v166 = vunpack.c.h.b16 %v71
    %v167 = vunpack.c.l.b16 %v72
    %v168 = vunpack.c.h.b16 %v72
    %v169 = vunpack.c.l.b16 %v73
    %v170 = vunpack.c.h.b16 %v73
    %v171 = vunpack.c.l.b16 %v74
    %v172 = vunpack.c.h.b16 %v74
    %v173 = vunpack.c.l.b16 %v75
    %v174 = vunpack.c.h.b16 %v75
    %v175 = vunpack.c.l.b16 %v76
    %v176 = vunpack.c.h.b16 %v76
    %v177 = vunpack.c.l.b16 %v77
    %v178 = vunpack.c.h.b16 %v77
    %v179 = vunpack.c.l.b16 %v78
    %v180 = vunpack.c.h.b16 %v78
    %v181 = vpack.c.b16 %v121, %v117
    %v182 = vpack.c.b16 %v122, %v118
    %v183 = vpack.c.b16 %v123, %v119
    %v184 = vpack.c.b16 %v124, %v120
    %v185 = vpack.c.b16 %v129, %v125
    %v186 = vpack.c.b16 %v130, %v126
    %v187 = vpack.c.b16 %v131, %v127
    %v188 = vpack.c.b16 %v132, %v128
    %v189 = vpack.c.b16 %v137, %v133
    %v190 = vpack.c.b16 %v138, %v134
    %v191 = vpack.c.b16 %v139, %v135
    %v192 = vpack.c.b16 %v140, %v136
    %v193 = vpack.c.b16 %v145, %v141
    %v194 = vpack.c.b16 %v146, %v142
    %v195 = vpack.c.b16 %v147, %v143
    %v196 = vpack.c.b16 %v148, %v144
    %v197 = vpack.c.b16 %v153, %v149
    %v198 = vpack.c.b16 %v154, %v150
    %v199 = vpack.c.b16 %v155, %v151
    %v200 = vpack.c.b16 %v156, %v152
    %v201 = vpack.c.b16 %v161, %v157
    %v202 = vpack.c.b16 %v162, %v158
    %v203 = vpack.c.b16 %v163, %v159
    %v204 = vpack.c.b16 %v164, %v160
    %v205 = vpack.c.b16 %v169, %v165
    %v206 = vpack.c.b16 %v170, %v166
    %v207 = vpack.c.b16 %v171, %v167
    %v208 = vpack.c.b16 %v172, %v168
    %v209 = vpack.c.b16 %v177, %v173
    %v210 = vpack.c.b16 %v178, %v174
    %v211 = vpack.c.b16 %v179, %v175
    %v212 = vpack.c.b16 %v180, %v176
    %245 = vmatprep.subr.bf16.mxu0 %v210
    %246 = vmatpush1.bf16.msra.mxu0 %v209
    %247 = vmatprep.subr.bf16.mxu0 %v206
    %248 = vmatpush1.bf16.msra.mxu0 %v205
    %249 = vmatprep.subr.bf16.mxu0 %v202
    %250 = vmatpush1.bf16.msra.mxu0 %v201
    %251 = vmatprep.subr.bf16.mxu0 %v198
    %252 = vmatpush1.bf16.msra.mxu0 %v197
    %253 = vmatprep.subr.bf16.mxu0 %v194
    %254 = vmatpush1.bf16.msra.mxu0 %v193
    %255 = vmatprep.subr.bf16.mxu0 %v190
    %256 = vmatpush1.bf16.msra.mxu0 %v189
    %257 = vmatprep.subr.bf16.mxu0 %v186
    %258 = vmatpush1.bf16.msra.mxu0 %v185
    %259 = vmatprep.subr.bf16.mxu0 %v182
    %260 = vmatpush1.bf16.msra.mxu0 %v181
    %261 = vmatprep.subr.bf16.mxu0 0
    %262 = vmatpush2.bf16.msra.mxu0 0
    %263 = vmatprep.subr.bf16.mxu0 0
    %264 = vmatpush2.bf16.msra.mxu0 0
    %265 = vmatprep.subr.bf16.mxu0 0
    %266 = vmatpush2.bf16.msra.mxu0 0
    %267 = vmatprep.subr.bf16.mxu0 0
    %268 = vmatpush2.bf16.msra.mxu0 0
    %269 = vmatprep.subr.bf16.mxu0 0
    %270 = vmatpush2.bf16.msra.mxu0 0
    %271 = vmatprep.subr.bf16.mxu0 0
    %272 = vmatpush2.bf16.msra.mxu0 0
    %273 = vmatprep.subr.bf16.mxu0 0
    %274 = vmatpush2.bf16.msra.mxu0 0
    %275 = vmatprep.subr.bf16.mxu0 0
    %276 = vmatpush2.bf16.msra.mxu0 0
    %277 = vmatprep.mubr.bf16.mxu0 0
    %278 = vmatmul.mubr.bf16.gmra.mxu0 %v84
    %v279 = vpop.f32.mrf.mxu0
    %v280 = vadd.f32 0.0, %v279
    %v281 = vpop.f32.mrf.mxu0
    %v282 = vadd.f32 0.0, %v281
    %v283 = vpop.f32.mrf.mxu0
    %v284 = vpop.f32.mrf.mxu0
    %285 = vdwg.mxu0
    %286 = vmatprep.subr.bf16.mxu0 %v212
    %287 = vmatpush1.bf16.msra.mxu0 %v211
    %288 = vmatprep.subr.bf16.mxu0 %v208
    %289 = vmatpush1.bf16.msra.mxu0 %v207
    %290 = vmatprep.subr.bf16.mxu0 %v204
    %291 = vmatpush1.bf16.msra.mxu0 %v203
    %292 = vmatprep.subr.bf16.mxu0 %v200
    %293 = vmatpush1.bf16.msra.mxu0 %v199
    %294 = vmatprep.subr.bf16.mxu0 %v196
    %295 = vmatpush1.bf16.msra.mxu0 %v195
    %296 = vmatprep.subr.bf16.mxu0 %v192
    %297 = vmatpush1.bf16.msra.mxu0 %v191
    %298 = vmatprep.subr.bf16.mxu0 %v188
    %299 = vmatpush1.bf16.msra.mxu0 %v187
    %300 = vmatprep.subr.bf16.mxu0 %v184
    %301 = vmatpush1.bf16.msra.mxu0 %v183
    %302 = vmatprep.subr.bf16.mxu0 0
    %303 = vmatpush2.bf16.msra.mxu0 0
    %304 = vmatprep.subr.bf16.mxu0 0
    %305 = vmatpush2.bf16.msra.mxu0 0
    %306 = vmatprep.subr.bf16.mxu0 0
    %307 = vmatpush2.bf16.msra.mxu0 0
    %308 = vmatprep.subr.bf16.mxu0 0
    %309 = vmatpush2.bf16.msra.mxu0 0
    %310 = vmatprep.subr.bf16.mxu0 0
    %311 = vmatpush2.bf16.msra.mxu0 0
    %312 = vmatprep.subr.bf16.mxu0 0
    %313 = vmatpush2.bf16.msra.mxu0 0
    %314 = vmatprep.subr.bf16.mxu0 0
    %315 = vmatpush2.bf16.msra.mxu0 0
    %316 = vmatprep.subr.bf16.mxu0 0
    %317 = vmatpush2.bf16.msra.mxu0 0
    %318 = vmatprep.mubr.bf16.mxu0 0
    %319 = vmatmul.mubr.bf16.gmra.mxu0 %v84
    %v320 = vpop.f32.mrf.mxu0
    %v321 = vadd.f32 0.0, %v320
    %v322 = vpop.f32.mrf.mxu0
    %v323 = vadd.f32 0.0, %v322
    %v324 = vpop.f32.mrf.mxu0
    %v325 = vpop.f32.mrf.mxu0
    %326 = vdwg.mxu0
    %v327 = vadd.f32 %v79, %v280
    %v328 = vadd.f32 %v80, %v282
    %v329 = vadd.f32 %v81, %v321
    %v330 = vadd.f32 %v82, %v323
    %v331 = vxor.u32 %v327, 2147483648
    %v332 = vmul.f32 %v331, 1.442695
    %v333 = vpow.pop %v332
    %v334 = vadd.f32 %v333, 1.0
    %v335 = vrcp.pop %v334
    %v336 = vmul.f32 1.0, %v335
    %v337 = vxor.u32 %v328, 2147483648
    %v338 = vmul.f32 %v337, 1.442695
    %v339 = vpow.pop %v338
    %v340 = vadd.f32 %v339, 1.0
    %v341 = vrcp.pop %v340
    %v342 = vmul.f32 1.0, %v341
    %v343 = vtanh.pop %v329
    %v344 = vxor.u32 %v330, 2147483648
    %v345 = vmul.f32 %v344, 1.442695
    %v346 = vpow.pop %v345
    %v347 = vadd.f32 %v346, 1.0
    %v348 = vrcp.pop %v347
    %v349 = vmul.f32 1.0, %v348
    %v350 = vld [vmem:[#allocation3] sm:$0xff]
    %v351 = vmul.f32 %v342, %v350
    %v352 = vmul.f32 %v336, %v343
    %v353 = vadd.f32 %v351, %v352
    %v354 = vtanh.pop %v353
    %v355 = vmul.f32 %v349, %v354
    %356 = vst [vmem:[#allocation2] sm:$0xff] %v355
    %357 = vst [vmem:[#allocation3] sm:$0xff] %v353
    %358 = vst [vmem:[#allocation9] sm:$0xff] %v355
    %s359 = scalar_lea.vmem [#allocation4], 32
    %v360 = vld [vmem:[%s359] sm:$0xff]
    %v361 = vld [vmem:[%s359 + $0x8] sm:$0xff]
    %v362 = vld [vmem:[%s359 + $0x10] sm:$0xff]
    %v363 = vld [vmem:[%s359 + $0x18] sm:$0xff]
    %v364 = vld [vmem:[#allocation2] sm:$0xff]
    %v365 = vpack.c.bf16 %v364, %v364
    %366 = vmatprep.subr.bf16.mxu0 %v210
    %367 = vmatpush1.bf16.msra.mxu0 %v209
    %368 = vmatprep.subr.bf16.mxu0 %v206
    %369 = vmatpush1.bf16.msra.mxu0 %v205
    %370 = vmatprep.subr.bf16.mxu0 %v202
    %371 = vmatpush1.bf16.msra.mxu0 %v201
    %372 = vmatprep.subr.bf16.mxu0 %v198
    %373 = vmatpush1.bf16.msra.mxu0 %v197
    %374 = vmatprep.subr.bf16.mxu0 %v194
    %375 = vmatpush1.bf16.msra.mxu0 %v193
    %376 = vmatprep.subr.bf16.mxu0 %v190
    %377 = vmatpush1.bf16.msra.mxu0 %v189
    %378 = vmatprep.subr.bf16.mxu0 %v186
    %379 = vmatpush1.bf16.msra.mxu0 %v185
    %380 = vmatprep.subr.bf16.mxu0 %v182
    %381 = vmatpush1.bf16.msra.mxu0 %v181
    %382 = vmatprep.subr.bf16.mxu0 0
    %383 = vmatpush2.bf16.msra.mxu0 0
    %384 = vmatprep.subr.bf16.mxu0 0
    %385 = vmatpush2.bf16.msra.mxu0 0
    %386 = vmatprep.subr.bf16.mxu0 0
    %387 = vmatpush2.bf16.msra.mxu0 0
    %388 = vmatprep.subr.bf16.mxu0 0
    %389 = vmatpush2.bf16.msra.mxu0 0
    %390 = vmatprep.subr.bf16.mxu0 0
    %391 = vmatpush2.bf16.msra.mxu0 0
    %392 = vmatprep.subr.bf16.mxu0 0
    %393 = vmatpush2.bf16.msra.mxu0 0
    %394 = vmatprep.subr.bf16.mxu0 0
    %395 = vmatpush2.bf16.msra.mxu0 0
    %396 = vmatprep.subr.bf16.mxu0 0
    %397 = vmatpush2.bf16.msra.mxu0 0
    %398 = vmatprep.mubr.bf16.mxu0 0
    %399 = vmatmul.mubr.bf16.gmra.mxu0 %v365
    %v400 = vpop.f32.mrf.mxu0
    %v401 = vadd.f32 0.0, %v400
    %v402 = vpop.f32.mrf.mxu0
    %v403 = vadd.f32 0.0, %v402
    %v404 = vpop.f32.mrf.mxu0
    %v405 = vpop.f32.mrf.mxu0
    %406 = vdwg.mxu0
    %407 = vmatprep.subr.bf16.mxu0 %v212
    %408 = vmatpush1.bf16.msra.mxu0 %v211
    %409 = vmatprep.subr.bf16.mxu0 %v208
    %410 = vmatpush1.bf16.msra.mxu0 %v207
    %411 = vmatprep.subr.bf16.mxu0 %v204
    %412 = vmatpush1.bf16.msra.mxu0 %v203
    %413 = vmatprep.subr.bf16.mxu0 %v200
    %414 = vmatpush1.bf16.msra.mxu0 %v199
    %415 = vmatprep.subr.bf16.mxu0 %v196
    %416 = vmatpush1.bf16.msra.mxu0 %v195
    %417 = vmatprep.subr.bf16.mxu0 %v192
    %418 = vmatpush1.bf16.msra.mxu0 %v191
    %419 = vmatprep.subr.bf16.mxu0 %v188
    %420 = vmatpush1.bf16.msra.mxu0 %v187
    %421 = vmatprep.subr.bf16.mxu0 %v184
    %422 = vmatpush1.bf16.msra.mxu0 %v183
    %423 = vmatprep.subr.bf16.mxu0 0
    %424 = vmatpush2.bf16.msra.mxu0 0
    %425 = vmatprep.subr.bf16.mxu0 0
    %426 = vmatpush2.bf16.msra.mxu0 0
    %427 = vmatprep.subr.bf16.mxu0 0
    %428 = vmatpush2.bf16.msra.mxu0 0
    %429 = vmatprep.subr.bf16.mxu0 0
    %430 = vmatpush2.bf16.msra.mxu0 0
    %431 = vmatprep.subr.bf16.mxu0 0
    %432 = vmatpush2.bf16.msra.mxu0 0
    %433 = vmatprep.subr.bf16.mxu0 0
    %434 = vmatpush2.bf16.msra.mxu0 0
    %435 = vmatprep.subr.bf16.mxu0 0
    %436 = vmatpush2.bf16.msra.mxu0 0
    %437 = vmatprep.subr.bf16.mxu0 0
    %438 = vmatpush2.bf16.msra.mxu0 0
    %439 = vmatprep.mubr.bf16.mxu0 0
    %440 = vmatmul.mubr.bf16.gmra.mxu0 %v365
    %v441 = vpop.f32.mrf.mxu0
    %v442 = vadd.f32 0.0, %v441
    %v443 = vpop.f32.mrf.mxu0
    %v444 = vadd.f32 0.0, %v443
    %v445 = vpop.f32.mrf.mxu0
    %v446 = vpop.f32.mrf.mxu0
    %447 = vdwg.mxu0
    %v448 = vadd.f32 %v360, %v401
    %v449 = vadd.f32 %v361, %v403
    %v450 = vadd.f32 %v362, %v442
    %v451 = vadd.f32 %v363, %v444
    %v452 = vxor.u32 %v448, 2147483648
    %v453 = vmul.f32 %v452, 1.442695
    %v454 = vpow.pop %v453
    %v455 = vadd.f32 %v454, 1.0
    %v456 = vrcp.pop %v455
    %v457 = vmul.f32 1.0, %v456
    %v458 = vxor.u32 %v449, 2147483648
    %v459 = vmul.f32 %v458, 1.442695
    %v460 = vpow.pop %v459
    %v461 = vadd.f32 %v460, 1.0
    %v462 = vrcp.pop %v461
    %v463 = vmul.f32 1.0, %v462
    %v464 = vtanh.pop %v450
    %v465 = vxor.u32 %v451, 2147483648
    %v466 = vmul.f32 %v465, 1.442695
    %v467 = vpow.pop %v466
    %v468 = vadd.f32 %v467, 1.0
    %v469 = vrcp.pop %v468
    %v470 = vmul.f32 1.0, %v469
    %v471 = vld [vmem:[#allocation3] sm:$0xff]
    %v472 = vmul.f32 %v463, %v471
    %v473 = vmul.f32 %v457, %v464
    %v474 = vadd.f32 %v472, %v473
    %v475 = vtanh.pop %v474
    %v476 = vmul.f32 %v470, %v475
    %477 = vst [vmem:[#allocation2] sm:$0xff] %v476
    %478 = vst [vmem:[#allocation3] sm:$0xff] %v474
    %s479 = scalar_lea.vmem [#allocation9], 8
    %480 = vst [vmem:[%s479] sm:$0xff] %v476
    %s481 = scalar_lea.vmem [#allocation4], 64
    %v482 = vld [vmem:[%s481] sm:$0xff]
    %v483 = vld [vmem:[%s481 + $0x8] sm:$0xff]
    %v484 = vld [vmem:[%s481 + $0x10] sm:$0xff]
    %v485 = vld [vmem:[%s481 + $0x18] sm:$0xff]
    %v486 = vld [vmem:[#allocation2] sm:$0xff]
    %v487 = vpack.c.bf16 %v486, %v486
    %488 = vmatprep.subr.bf16.mxu0 %v210
    %489 = vmatpush1.bf16.msra.mxu0 %v209
    %490 = vmatprep.subr.bf16.mxu0 %v206
    %491 = vmatpush1.bf16.msra.mxu0 %v205
    %492 = vmatprep.subr.bf16.mxu0 %v202
    %493 = vmatpush1.bf16.msra.mxu0 %v201
    %494 = vmatprep.subr.bf16.mxu0 %v198
    %495 = vmatpush1.bf16.msra.mxu0 %v197
    %496 = vmatprep.subr.bf16.mxu0 %v194
    %497 = vmatpush1.bf16.msra.mxu0 %v193
    %498 = vmatprep.subr.bf16.mxu0 %v190
    %499 = vmatpush1.bf16.msra.mxu0 %v189
    %500 = vmatprep.subr.bf16.mxu0 %v186
    %501 = vmatpush1.bf16.msra.mxu0 %v185
    %502 = vmatprep.subr.bf16.mxu0 %v182
    %503 = vmatpush1.bf16.msra.mxu0 %v181
    %504 = vmatprep.subr.bf16.mxu0 0
    %505 = vmatpush2.bf16.msra.mxu0 0
    %506 = vmatprep.subr.bf16.mxu0 0
    %507 = vmatpush2.bf16.msra.mxu0 0
    %508 = vmatprep.subr.bf16.mxu0 0
    %509 = vmatpush2.bf16.msra.mxu0 0
    %510 = vmatprep.subr.bf16.mxu0 0
    %511 = vmatpush2.bf16.msra.mxu0 0
    %512 = vmatprep.subr.bf16.mxu0 0
    %513 = vmatpush2.bf16.msra.mxu0 0
    %514 = vmatprep.subr.bf16.mxu0 0
    %515 = vmatpush2.bf16.msra.mxu0 0
    %516 = vmatprep.subr.bf16.mxu0 0
    %517 = vmatpush2.bf16.msra.mxu0 0
    %518 = vmatprep.subr.bf16.mxu0 0
    %519 = vmatpush2.bf16.msra.mxu0 0
    %520 = vmatprep.mubr.bf16.mxu0 0
    %521 = vmatmul.mubr.bf16.gmra.mxu0 %v487
    %v522 = vpop.f32.mrf.mxu0
    %v523 = vadd.f32 0.0, %v522
    %v524 = vpop.f32.mrf.mxu0
    %v525 = vadd.f32 0.0, %v524
    %v526 = vpop.f32.mrf.mxu0
    %v527 = vpop.f32.mrf.mxu0
    %528 = vdwg.mxu0
    %529 = vmatprep.subr.bf16.mxu0 %v212
    %530 = vmatpush1.bf16.msra.mxu0 %v211
    %531 = vmatprep.subr.bf16.mxu0 %v208
    %532 = vmatpush1.bf16.msra.mxu0 %v207
    %533 = vmatprep.subr.bf16.mxu0 %v204
    %534 = vmatpush1.bf16.msra.mxu0 %v203
    %535 = vmatprep.subr.bf16.mxu0 %v200
    %536 = vmatpush1.bf16.msra.mxu0 %v199
    %537 = vmatprep.subr.bf16.mxu0 %v196
    %538 = vmatpush1.bf16.msra.mxu0 %v195
    %539 = vmatprep.subr.bf16.mxu0 %v192
    %540 = vmatpush1.bf16.msra.mxu0 %v191
    %541 = vmatprep.subr.bf16.mxu0 %v188
    %542 = vmatpush1.bf16.msra.mxu0 %v187
    %543 = vmatprep.subr.bf16.mxu0 %v184
    %544 = vmatpush1.bf16.msra.mxu0 %v183
    %545 = vmatprep.subr.bf16.mxu0 0
    %546 = vmatpush2.bf16.msra.mxu0 0
    %547 = vmatprep.subr.bf16.mxu0 0
    %548 = vmatpush2.bf16.msra.mxu0 0
    %549 = vmatprep.subr.bf16.mxu0 0
    %550 = vmatpush2.bf16.msra.mxu0 0
    %551 = vmatprep.subr.bf16.mxu0 0
    %552 = vmatpush2.bf16.msra.mxu0 0
    %553 = vmatprep.subr.bf16.mxu0 0
    %554 = vmatpush2.bf16.msra.mxu0 0
    %555 = vmatprep.subr.bf16.mxu0 0
    %556 = vmatpush2.bf16.msra.mxu0 0
    %557 = vmatprep.subr.bf16.mxu0 0
    %558 = vmatpush2.bf16.msra.mxu0 0
    %559 = vmatprep.subr.bf16.mxu0 0
    %560 = vmatpush2.bf16.msra.mxu0 0
    %561 = vmatprep.mubr.bf16.mxu0 0
    %562 = vmatmul.mubr.bf16.gmra.mxu0 %v487
    %v563 = vpop.f32.mrf.mxu0
    %v564 = vadd.f32 0.0, %v563
    %v565 = vpop.f32.mrf.mxu0
    %v566 = vadd.f32 0.0, %v565
    %v567 = vpop.f32.mrf.mxu0
    %v568 = vpop.f32.mrf.mxu0
    %569 = vdwg.mxu0
    %v570 = vadd.f32 %v482, %v523
    %v571 = vadd.f32 %v483, %v525
    %v572 = vadd.f32 %v484, %v564
    %v573 = vadd.f32 %v485, %v566
    %v574 = vxor.u32 %v570, 2147483648
    %v575 = vmul.f32 %v574, 1.442695
    %v576 = vpow.pop %v575
    %v577 = vadd.f32 %v576, 1.0
    %v578 = vrcp.pop %v577
    %v579 = vmul.f32 1.0, %v578
    %v580 = vxor.u32 %v571, 2147483648
    %v581 = vmul.f32 %v580, 1.442695
    %v582 = vpow.pop %v581
    %v583 = vadd.f32 %v582, 1.0
    %v584 = vrcp.pop %v583
    %v585 = vmul.f32 1.0, %v584
    %v586 = vtanh.pop %v572
    %v587 = vxor.u32 %v573, 2147483648
    %v588 = vmul.f32 %v587, 1.442695
    %v589 = vpow.pop %v588
    %v590 = vadd.f32 %v589, 1.0
    %v591 = vrcp.pop %v590
    %v592 = vmul.f32 1.0, %v591
    %v593 = vld [vmem:[#allocation3] sm:$0xff]
    %v594 = vmul.f32 %v585, %v593
    %v595 = vmul.f32 %v579, %v586
    %v596 = vadd.f32 %v594, %v595
    %v597 = vtanh.pop %v596
    %v598 = vmul.f32 %v592, %v597
    %599 = vst [vmem:[#allocation2] sm:$0xff] %v598
    %600 = vst [vmem:[#allocation3] sm:$0xff] %v596
    %s601 = scalar_lea.vmem [#allocation9], 16
    %602 = vst [vmem:[%s601] sm:$0xff] %v598
    %s603 = scalar_lea.vmem [#allocation4], 96
    %v604 = vld [vmem:[%s603] sm:$0xff]
    %v605 = vld [vmem:[%s603 + $0x8] sm:$0xff]
    %v606 = vld [vmem:[%s603 + $0x10] sm:$0xff]
    %v607 = vld [vmem:[%s603 + $0x18] sm:$0xff]
    %v608 = vld [vmem:[#allocation2] sm:$0xff]
    %v609 = vpack.c.bf16 %v608, %v608
    %610 = vmatprep.subr.bf16.mxu0 %v210
    %611 = vmatpush1.bf16.msra.mxu0 %v209
    %612 = vmatprep.subr.bf16.mxu0 %v206
    %613 = vmatpush1.bf16.msra.mxu0 %v205
    %614 = vmatprep.subr.bf16.mxu0 %v202
    %615 = vmatpush1.bf16.msra.mxu0 %v201
    %616 = vmatprep.subr.bf16.mxu0 %v198
    %617 = vmatpush1.bf16.msra.mxu0 %v197
    %618 = vmatprep.subr.bf16.mxu0 %v194
    %619 = vmatpush1.bf16.msra.mxu0 %v193
    %620 = vmatprep.subr.bf16.mxu0 %v190
    %621 = vmatpush1.bf16.msra.mxu0 %v189
    %622 = vmatprep.subr.bf16.mxu0 %v186
    %623 = vmatpush1.bf16.msra.mxu0 %v185
    %624 = vmatprep.subr.bf16.mxu0 %v182
    %625 = vmatpush1.bf16.msra.mxu0 %v181
    %626 = vmatprep.subr.bf16.mxu0 0
    %627 = vmatpush2.bf16.msra.mxu0 0
    %628 = vmatprep.subr.bf16.mxu0 0
    %629 = vmatpush2.bf16.msra.mxu0 0
    %630 = vmatprep.subr.bf16.mxu0 0
    %631 = vmatpush2.bf16.msra.mxu0 0
    %632 = vmatprep.subr.bf16.mxu0 0
    %633 = vmatpush2.bf16.msra.mxu0 0
    %634 = vmatprep.subr.bf16.mxu0 0
    %635 = vmatpush2.bf16.msra.mxu0 0
    %636 = vmatprep.subr.bf16.mxu0 0
    %637 = vmatpush2.bf16.msra.mxu0 0
    %638 = vmatprep.subr.bf16.mxu0 0
    %639 = vmatpush2.bf16.msra.mxu0 0
    %640 = vmatprep.subr.bf16.mxu0 0
    %641 = vmatpush2.bf16.msra.mxu0 0
    %642 = vmatprep.mubr.bf16.mxu0 0
    %643 = vmatmul.mubr.bf16.gmra.mxu0 %v609
    %v644 = vpop.f32.mrf.mxu0
    %v645 = vadd.f32 0.0, %v644
    %v646 = vpop.f32.mrf.mxu0
    %v647 = vadd.f32 0.0, %v646
    %v648 = vpop.f32.mrf.mxu0
    %v649 = vpop.f32.mrf.mxu0
    %650 = vdwg.mxu0
    %651 = vmatprep.subr.bf16.mxu0 %v212
    %652 = vmatpush1.bf16.msra.mxu0 %v211
    %653 = vmatprep.subr.bf16.mxu0 %v208
    %654 = vmatpush1.bf16.msra.mxu0 %v207
    %655 = vmatprep.subr.bf16.mxu0 %v204
    %656 = vmatpush1.bf16.msra.mxu0 %v203
    %657 = vmatprep.subr.bf16.mxu0 %v200
    %658 = vmatpush1.bf16.msra.mxu0 %v199
    %659 = vmatprep.subr.bf16.mxu0 %v196
    %660 = vmatpush1.bf16.msra.mxu0 %v195
    %661 = vmatprep.subr.bf16.mxu0 %v192
    %662 = vmatpush1.bf16.msra.mxu0 %v191
    %663 = vmatprep.subr.bf16.mxu0 %v188
    %664 = vmatpush1.bf16.msra.mxu0 %v187
    %665 = vmatprep.subr.bf16.mxu0 %v184
    %666 = vmatpush1.bf16.msra.mxu0 %v183
    %667 = vmatprep.subr.bf16.mxu0 0
    %668 = vmatpush2.bf16.msra.mxu0 0
    %669 = vmatprep.subr.bf16.mxu0 0
    %670 = vmatpush2.bf16.msra.mxu0 0
    %671 = vmatprep.subr.bf16.mxu0 0
    %672 = vmatpush2.bf16.msra.mxu0 0
    %673 = vmatprep.subr.bf16.mxu0 0
    %674 = vmatpush2.bf16.msra.mxu0 0
    %675 = vmatprep.subr.bf16.mxu0 0
    %676 = vmatpush2.bf16.msra.mxu0 0
    %677 = vmatprep.subr.bf16.mxu0 0
    %678 = vmatpush2.bf16.msra.mxu0 0
    %679 = vmatprep.subr.bf16.mxu0 0
    %680 = vmatpush2.bf16.msra.mxu0 0
    %681 = vmatprep.subr.bf16.mxu0 0
    %682 = vmatpush2.bf16.msra.mxu0 0
    %683 = vmatprep.mubr.bf16.mxu0 0
    %684 = vmatmul.mubr.bf16.gmra.mxu0 %v609
    %v685 = vpop.f32.mrf.mxu0
    %v686 = vadd.f32 0.0, %v685
    %v687 = vpop.f32.mrf.mxu0
    %v688 = vadd.f32 0.0, %v687
    %v689 = vpop.f32.mrf.mxu0
    %v690 = vpop.f32.mrf.mxu0
    %691 = vdwg.mxu0
    %v692 = vadd.f32 %v604, %v645
    %v693 = vadd.f32 %v605, %v647
    %v694 = vadd.f32 %v606, %v686
    %v695 = vadd.f32 %v607, %v688
    %v696 = vxor.u32 %v692, 2147483648
    %v697 = vmul.f32 %v696, 1.442695
    %v698 = vpow.pop %v697
    %v699 = vadd.f32 %v698, 1.0
    %v700 = vrcp.pop %v699
    %v701 = vmul.f32 1.0, %v700
    %v702 = vxor.u32 %v693, 2147483648
    %v703 = vmul.f32 %v702, 1.442695
    %v704 = vpow.pop %v703
    %v705 = vadd.f32 %v704, 1.0
    %v706 = vrcp.pop %v705
    %v707 = vmul.f32 1.0, %v706
    %v708 = vtanh.pop %v694
    %v709 = vxor.u32 %v695, 2147483648
    %v710 = vmul.f32 %v709, 1.442695
    %v711 = vpow.pop %v710
    %v712 = vadd.f32 %v711, 1.0
    %v713 = vrcp.pop %v712
    %v714 = vmul.f32 1.0, %v713
    %v715 = vld [vmem:[#allocation3] sm:$0xff]
    %v716 = vmul.f32 %v707, %v715
    %v717 = vmul.f32 %v701, %v708
    %v718 = vadd.f32 %v716, %v717
    %v719 = vtanh.pop %v718
    %v720 = vmul.f32 %v714, %v719
    %721 = vst [vmem:[#allocation2] sm:$0xff] %v720
    %722 = vst [vmem:[#allocation3] sm:$0xff] %v718
    %s723 = scalar_lea.vmem [#allocation9], 24
    %724 = vst [vmem:[%s723] sm:$0xff] %v720
    %s725 = scalar_lea.vmem [#allocation4], 128
    %v726 = vld [vmem:[%s725] sm:$0xff]
    %v727 = vld [vmem:[%s725 + $0x8] sm:$0xff]
    %v728 = vld [vmem:[%s725 + $0x10] sm:$0xff]
    %v729 = vld [vmem:[%s725 + $0x18] sm:$0xff]
    %v730 = vld [vmem:[#allocation2] sm:$0xff]
    %v731 = vpack.c.bf16 %v730, %v730
    %732 = vmatprep.subr.bf16.mxu0 %v210
    %733 = vmatpush1.bf16.msra.mxu0 %v209
    %734 = vmatprep.subr.bf16.mxu0 %v206
    %735 = vmatpush1.bf16.msra.mxu0 %v205
    %736 = vmatprep.subr.bf16.mxu0 %v202
    %737 = vmatpush1.bf16.msra.mxu0 %v201
    %738 = vmatprep.subr.bf16.mxu0 %v198
    %739 = vmatpush1.bf16.msra.mxu0 %v197
    %740 = vmatprep.subr.bf16.mxu0 %v194
    %741 = vmatpush1.bf16.msra.mxu0 %v193
    %742 = vmatprep.subr.bf16.mxu0 %v190
    %743 = vmatpush1.bf16.msra.mxu0 %v189
    %744 = vmatprep.subr.bf16.mxu0 %v186
    %745 = vmatpush1.bf16.msra.mxu0 %v185
    %746 = vmatprep.subr.bf16.mxu0 %v182
    %747 = vmatpush1.bf16.msra.mxu0 %v181
    %748 = vmatprep.subr.bf16.mxu0 0
    %749 = vmatpush2.bf16.msra.mxu0 0
    %750 = vmatprep.subr.bf16.mxu0 0
    %751 = vmatpush2.bf16.msra.mxu0 0
    %752 = vmatprep.subr.bf16.mxu0 0
    %753 = vmatpush2.bf16.msra.mxu0 0
    %754 = vmatprep.subr.bf16.mxu0 0
    %755 = vmatpush2.bf16.msra.mxu0 0
    %756 = vmatprep.subr.bf16.mxu0 0
    %757 = vmatpush2.bf16.msra.mxu0 0
    %758 = vmatprep.subr.bf16.mxu0 0
    %759 = vmatpush2.bf16.msra.mxu0 0
    %760 = vmatprep.subr.bf16.mxu0 0
    %761 = vmatpush2.bf16.msra.mxu0 0
    %762 = vmatprep.subr.bf16.mxu0 0
    %763 = vmatpush2.bf16.msra.mxu0 0
    %764 = vmatprep.mubr.bf16.mxu0 0
    %765 = vmatmul.mubr.bf16.gmra.mxu0 %v731
    %v766 = vpop.f32.mrf.mxu0
    %v767 = vadd.f32 0.0, %v766
    %v768 = vpop.f32.mrf.mxu0
    %v769 = vadd.f32 0.0, %v768
    %v770 = vpop.f32.mrf.mxu0
    %v771 = vpop.f32.mrf.mxu0
    %772 = vdwg.mxu0
    %773 = vmatprep.subr.bf16.mxu0 %v212
    %774 = vmatpush1.bf16.msra.mxu0 %v211
    %775 = vmatprep.subr.bf16.mxu0 %v208
    %776 = vmatpush1.bf16.msra.mxu0 %v207
    %777 = vmatprep.subr.bf16.mxu0 %v204
    %778 = vmatpush1.bf16.msra.mxu0 %v203
    %779 = vmatprep.subr.bf16.mxu0 %v200
    %780 = vmatpush1.bf16.msra.mxu0 %v199
    %781 = vmatprep.subr.bf16.mxu0 %v196
    %782 = vmatpush1.bf16.msra.mxu0 %v195
    %783 = vmatprep.subr.bf16.mxu0 %v192
    %784 = vmatpush1.bf16.msra.mxu0 %v191
    %785 = vmatprep.subr.bf16.mxu0 %v188
    %786 = vmatpush1.bf16.msra.mxu0 %v187
    %787 = vmatprep.subr.bf16.mxu0 %v184
    %788 = vmatpush1.bf16.msra.mxu0 %v183
    %789 = vmatprep.subr.bf16.mxu0 0
    %790 = vmatpush2.bf16.msra.mxu0 0
    %791 = vmatprep.subr.bf16.mxu0 0
    %792 = vmatpush2.bf16.msra.mxu0 0
    %793 = vmatprep.subr.bf16.mxu0 0
    %794 = vmatpush2.bf16.msra.mxu0 0
    %795 = vmatprep.subr.bf16.mxu0 0
    %796 = vmatpush2.bf16.msra.mxu0 0
    %797 = vmatprep.subr.bf16.mxu0 0
    %798 = vmatpush2.bf16.msra.mxu0 0
    %799 = vmatprep.subr.bf16.mxu0 0
    %800 = vmatpush2.bf16.msra.mxu0 0
    %801 = vmatprep.subr.bf16.mxu0 0
    %802 = vmatpush2.bf16.msra.mxu0 0
    %803 = vmatprep.subr.bf16.mxu0 0
    %804 = vmatpush2.bf16.msra.mxu0 0
    %805 = vmatprep.mubr.bf16.mxu0 0
    %806 = vmatmul.mubr.bf16.gmra.mxu0 %v731
    %v807 = vpop.f32.mrf.mxu0
    %v808 = vadd.f32 0.0, %v807
    %v809 = vpop.f32.mrf.mxu0
    %v810 = vadd.f32 0.0, %v809
    %v811 = vpop.f32.mrf.mxu0
    %v812 = vpop.f32.mrf.mxu0
    %813 = vdwg.mxu0
    %v814 = vadd.f32 %v726, %v767
    %v815 = vadd.f32 %v727, %v769
    %v816 = vadd.f32 %v728, %v808
    %v817 = vadd.f32 %v729, %v810
    %v818 = vxor.u32 %v814, 2147483648
    %v819 = vmul.f32 %v818, 1.442695
    %v820 = vpow.pop %v819
    %v821 = vadd.f32 %v820, 1.0
    %v822 = vrcp.pop %v821
    %v823 = vmul.f32 1.0, %v822
    %v824 = vxor.u32 %v815, 2147483648
    %v825 = vmul.f32 %v824, 1.442695
    %v826 = vpow.pop %v825
    %v827 = vadd.f32 %v826, 1.0
    %v828 = vrcp.pop %v827
    %v829 = vmul.f32 1.0, %v828
    %v830 = vtanh.pop %v816
    %v831 = vxor.u32 %v817, 2147483648
    %v832 = vmul.f32 %v831, 1.442695
    %v833 = vpow.pop %v832
    %v834 = vadd.f32 %v833, 1.0
    %v835 = vrcp.pop %v834
    %v836 = vmul.f32 1.0, %v835
    %v837 = vld [vmem:[#allocation3] sm:$0xff]
    %v838 = vmul.f32 %v829, %v837
    %v839 = vmul.f32 %v823, %v830
    %v840 = vadd.f32 %v838, %v839
    %v841 = vtanh.pop %v840
    %v842 = vmul.f32 %v836, %v841
    %843 = vst [vmem:[#allocation2] sm:$0xff] %v842
    %844 = vst [vmem:[#allocation3] sm:$0xff] %v840
    %s845 = scalar_lea.vmem [#allocation9], 32
    %846 = vst [vmem:[%s845] sm:$0xff] %v842
    %s847 = scalar_lea.vmem [#allocation4], 160
    %v848 = vld [vmem:[%s847] sm:$0xff]
    %v849 = vld [vmem:[%s847 + $0x8] sm:$0xff]
    %v850 = vld [vmem:[%s847 + $0x10] sm:$0xff]
    %v851 = vld [vmem:[%s847 + $0x18] sm:$0xff]
    %v852 = vld [vmem:[#allocation2] sm:$0xff]
    %v853 = vpack.c.bf16 %v852, %v852
    %854 = vmatprep.subr.bf16.mxu0 %v210
    %855 = vmatpush1.bf16.msra.mxu0 %v209
    %856 = vmatprep.subr.bf16.mxu0 %v206
    %857 = vmatpush1.bf16.msra.mxu0 %v205
    %858 = vmatprep.subr.bf16.mxu0 %v202
    %859 = vmatpush1.bf16.msra.mxu0 %v201
    %860 = vmatprep.subr.bf16.mxu0 %v198
    %861 = vmatpush1.bf16.msra.mxu0 %v197
    %862 = vmatprep.subr.bf16.mxu0 %v194
    %863 = vmatpush1.bf16.msra.mxu0 %v193
    %864 = vmatprep.subr.bf16.mxu0 %v190
    %865 = vmatpush1.bf16.msra.mxu0 %v189
    %866 = vmatprep.subr.bf16.mxu0 %v186
    %867 = vmatpush1.bf16.msra.mxu0 %v185
    %868 = vmatprep.subr.bf16.mxu0 %v182
    %869 = vmatpush1.bf16.msra.mxu0 %v181
    %870 = vmatprep.subr.bf16.mxu0 0
    %871 = vmatpush2.bf16.msra.mxu0 0
    %872 = vmatprep.subr.bf16.mxu0 0
    %873 = vmatpush2.bf16.msra.mxu0 0
    %874 = vmatprep.subr.bf16.mxu0 0
    %875 = vmatpush2.bf16.msra.mxu0 0
    %876 = vmatprep.subr.bf16.mxu0 0
    %877 = vmatpush2.bf16.msra.mxu0 0
    %878 = vmatprep.subr.bf16.mxu0 0
    %879 = vmatpush2.bf16.msra.mxu0 0
    %880 = vmatprep.subr.bf16.mxu0 0
    %881 = vmatpush2.bf16.msra.mxu0 0
    %882 = vmatprep.subr.bf16.mxu0 0
    %883 = vmatpush2.bf16.msra.mxu0 0
    %884 = vmatprep.subr.bf16.mxu0 0
    %885 = vmatpush2.bf16.msra.mxu0 0
    %886 = vmatprep.mubr.bf16.mxu0 0
    %887 = vmatmul.mubr.bf16.gmra.mxu0 %v853
    %v888 = vpop.f32.mrf.mxu0
    %v889 = vadd.f32 0.0, %v888
    %v890 = vpop.f32.mrf.mxu0
    %v891 = vadd.f32 0.0, %v890
    %v892 = vpop.f32.mrf.mxu0
    %v893 = vpop.f32.mrf.mxu0
    %894 = vdwg.mxu0
    %895 = vmatprep.subr.bf16.mxu0 %v212
    %896 = vmatpush1.bf16.msra.mxu0 %v211
    %897 = vmatprep.subr.bf16.mxu0 %v208
    %898 = vmatpush1.bf16.msra.mxu0 %v207
    %899 = vmatprep.subr.bf16.mxu0 %v204
    %900 = vmatpush1.bf16.msra.mxu0 %v203
    %901 = vmatprep.subr.bf16.mxu0 %v200
    %902 = vmatpush1.bf16.msra.mxu0 %v199
    %903 = vmatprep.subr.bf16.mxu0 %v196
    %904 = vmatpush1.bf16.msra.mxu0 %v195
    %905 = vmatprep.subr.bf16.mxu0 %v192
    %906 = vmatpush1.bf16.msra.mxu0 %v191
    %907 = vmatprep.subr.bf16.mxu0 %v188
    %908 = vmatpush1.bf16.msra.mxu0 %v187
    %909 = vmatprep.subr.bf16.mxu0 %v184
    %910 = vmatpush1.bf16.msra.mxu0 %v183
    %911 = vmatprep.subr.bf16.mxu0 0
    %912 = vmatpush2.bf16.msra.mxu0 0
    %913 = vmatprep.subr.bf16.mxu0 0
    %914 = vmatpush2.bf16.msra.mxu0 0
    %915 = vmatprep.subr.bf16.mxu0 0
    %916 = vmatpush2.bf16.msra.mxu0 0
    %917 = vmatprep.subr.bf16.mxu0 0
    %918 = vmatpush2.bf16.msra.mxu0 0
    %919 = vmatprep.subr.bf16.mxu0 0
    %920 = vmatpush2.bf16.msra.mxu0 0
    %921 = vmatprep.subr.bf16.mxu0 0
    %922 = vmatpush2.bf16.msra.mxu0 0
    %923 = vmatprep.subr.bf16.mxu0 0
    %924 = vmatpush2.bf16.msra.mxu0 0
    %925 = vmatprep.subr.bf16.mxu0 0
    %926 = vmatpush2.bf16.msra.mxu0 0
    %927 = vmatprep.mubr.bf16.mxu0 0
    %928 = vmatmul.mubr.bf16.gmra.mxu0 %v853
    %v929 = vpop.f32.mrf.mxu0
    %v930 = vadd.f32 0.0, %v929
    %v931 = vpop.f32.mrf.mxu0
    %v932 = vadd.f32 0.0, %v931
    %v933 = vpop.f32.mrf.mxu0
    %v934 = vpop.f32.mrf.mxu0
    %935 = vdwg.mxu0
    %v936 = vadd.f32 %v848, %v889
    %v937 = vadd.f32 %v849, %v891
    %v938 = vadd.f32 %v850, %v930
    %v939 = vadd.f32 %v851, %v932
    %v940 = vxor.u32 %v936, 2147483648
    %v941 = vmul.f32 %v940, 1.442695
    %v942 = vpow.pop %v941
    %v943 = vadd.f32 %v942, 1.0
    %v944 = vrcp.pop %v943
    %v945 = vmul.f32 1.0, %v944
    %v946 = vxor.u32 %v937, 2147483648
    %v947 = vmul.f32 %v946, 1.442695
    %v948 = vpow.pop %v947
    %v949 = vadd.f32 %v948, 1.0
    %v950 = vrcp.pop %v949
    %v951 = vmul.f32 1.0, %v950
    %v952 = vtanh.pop %v938
    %v953 = vxor.u32 %v939, 2147483648
    %v954 = vmul.f32 %v953, 1.442695
    %v955 = vpow.pop %v954
    %v956 = vadd.f32 %v955, 1.0
    %v957 = vrcp.pop %v956
    %v958 = vmul.f32 1.0, %v957
    %v959 = vld [vmem:[#allocation3] sm:$0xff]
    %v960 = vmul.f32 %v951, %v959
    %v961 = vmul.f32 %v945, %v952
    %v962 = vadd.f32 %v960, %v961
    %v963 = vtanh.pop %v962
    %v964 = vmul.f32 %v958, %v963
    %965 = vst [vmem:[#allocation2] sm:$0xff] %v964
    %966 = vst [vmem:[#allocation3] sm:$0xff] %v962
    %s967 = scalar_lea.vmem [#allocation9], 40
    %968 = vst [vmem:[%s967] sm:$0xff] %v964
    %s969 = scalar_lea.vmem [#allocation4], 192
    %v970 = vld [vmem:[%s969] sm:$0xff]
    %v971 = vld [vmem:[%s969 + $0x8] sm:$0xff]
    %v972 = vld [vmem:[%s969 + $0x10] sm:$0xff]
    %v973 = vld [vmem:[%s969 + $0x18] sm:$0xff]
    %v974 = vld [vmem:[#allocation2] sm:$0xff]
    %v975 = vpack.c.bf16 %v974, %v974
    %976 = vmatprep.subr.bf16.mxu0 %v210
    %977 = vmatpush1.bf16.msra.mxu0 %v209
    %978 = vmatprep.subr.bf16.mxu0 %v206
    %979 = vmatpush1.bf16.msra.mxu0 %v205
    %980 = vmatprep.subr.bf16.mxu0 %v202
    %981 = vmatpush1.bf16.msra.mxu0 %v201
    %982 = vmatprep.subr.bf16.mxu0 %v198
    %983 = vmatpush1.bf16.msra.mxu0 %v197
    %984 = vmatprep.subr.bf16.mxu0 %v194
    %985 = vmatpush1.bf16.msra.mxu0 %v193
    %986 = vmatprep.subr.bf16.mxu0 %v190
    %987 = vmatpush1.bf16.msra.mxu0 %v189
    %988 = vmatprep.subr.bf16.mxu0 %v186
    %989 = vmatpush1.bf16.msra.mxu0 %v185
    %990 = vmatprep.subr.bf16.mxu0 %v182
    %991 = vmatpush1.bf16.msra.mxu0 %v181
    %992 = vmatprep.subr.bf16.mxu0 0
    %993 = vmatpush2.bf16.msra.mxu0 0
    %994 = vmatprep.subr.bf16.mxu0 0
    %995 = vmatpush2.bf16.msra.mxu0 0
    %996 = vmatprep.subr.bf16.mxu0 0
    %997 = vmatpush2.bf16.msra.mxu0 0
    %998 = vmatprep.subr.bf16.mxu0 0
    %999 = vmatpush2.bf16.msra.mxu0 0
    %1000 = vmatprep.subr.bf16.mxu0 0
    %1001 = vmatpush2.bf16.msra.mxu0 0
    %1002 = vmatprep.subr.bf16.mxu0 0
    %1003 = vmatpush2.bf16.msra.mxu0 0
    %1004 = vmatprep.subr.bf16.mxu0 0
    %1005 = vmatpush2.bf16.msra.mxu0 0
    %1006 = vmatprep.subr.bf16.mxu0 0
    %1007 = vmatpush2.bf16.msra.mxu0 0
    %1008 = vmatprep.mubr.bf16.mxu0 0
    %1009 = vmatmul.mubr.bf16.gmra.mxu0 %v975
    %v1010 = vpop.f32.mrf.mxu0
    %v1011 = vadd.f32 0.0, %v1010
    %v1012 = vpop.f32.mrf.mxu0
    %v1013 = vadd.f32 0.0, %v1012
    %v1014 = vpop.f32.mrf.mxu0
    %v1015 = vpop.f32.mrf.mxu0
    %1016 = vdwg.mxu0
    %1017 = vmatprep.subr.bf16.mxu0 %v212
    %1018 = vmatpush1.bf16.msra.mxu0 %v211
    %1019 = vmatprep.subr.bf16.mxu0 %v208
    %1020 = vmatpush1.bf16.msra.mxu0 %v207
    %1021 = vmatprep.subr.bf16.mxu0 %v204
    %1022 = vmatpush1.bf16.msra.mxu0 %v203
    %1023 = vmatprep.subr.bf16.mxu0 %v200
    %1024 = vmatpush1.bf16.msra.mxu0 %v199
    %1025 = vmatprep.subr.bf16.mxu0 %v196
    %1026 = vmatpush1.bf16.msra.mxu0 %v195
    %1027 = vmatprep.subr.bf16.mxu0 %v192
    %1028 = vmatpush1.bf16.msra.mxu0 %v191
    %1029 = vmatprep.subr.bf16.mxu0 %v188
    %1030 = vmatpush1.bf16.msra.mxu0 %v187
    %1031 = vmatprep.subr.bf16.mxu0 %v184
    %1032 = vmatpush1.bf16.msra.mxu0 %v183
    %1033 = vmatprep.subr.bf16.mxu0 0
    %1034 = vmatpush2.bf16.msra.mxu0 0
    %1035 = vmatprep.subr.bf16.mxu0 0
    %1036 = vmatpush2.bf16.msra.mxu0 0
    %1037 = vmatprep.subr.bf16.mxu0 0
    %1038 = vmatpush2.bf16.msra.mxu0 0
    %1039 = vmatprep.subr.bf16.mxu0 0
    %1040 = vmatpush2.bf16.msra.mxu0 0
    %1041 = vmatprep.subr.bf16.mxu0 0
    %1042 = vmatpush2.bf16.msra.mxu0 0
    %1043 = vmatprep.subr.bf16.mxu0 0
    %1044 = vmatpush2.bf16.msra.mxu0 0
    %1045 = vmatprep.subr.bf16.mxu0 0
    %1046 = vmatpush2.bf16.msra.mxu0 0
    %1047 = vmatprep.subr.bf16.mxu0 0
    %1048 = vmatpush2.bf16.msra.mxu0 0
    %1049 = vmatprep.mubr.bf16.mxu0 0
    %1050 = vmatmul.mubr.bf16.gmra.mxu0 %v975
    %v1051 = vpop.f32.mrf.mxu0
    %v1052 = vadd.f32 0.0, %v1051
    %v1053 = vpop.f32.mrf.mxu0
    %v1054 = vadd.f32 0.0, %v1053
    %v1055 = vpop.f32.mrf.mxu0
    %v1056 = vpop.f32.mrf.mxu0
    %1057 = vdwg.mxu0
    %v1058 = vadd.f32 %v970, %v1011
    %v1059 = vadd.f32 %v971, %v1013
    %v1060 = vadd.f32 %v972, %v1052
    %v1061 = vadd.f32 %v973, %v1054
    %v1062 = vxor.u32 %v1058, 2147483648
    %v1063 = vmul.f32 %v1062, 1.442695
    %v1064 = vpow.pop %v1063
    %v1065 = vadd.f32 %v1064, 1.0
    %v1066 = vrcp.pop %v1065
    %v1067 = vmul.f32 1.0, %v1066
    %v1068 = vxor.u32 %v1059, 2147483648
    %v1069 = vmul.f32 %v1068, 1.442695
    %v1070 = vpow.pop %v1069
    %v1071 = vadd.f32 %v1070, 1.0
    %v1072 = vrcp.pop %v1071
    %v1073 = vmul.f32 1.0, %v1072
    %v1074 = vtanh.pop %v1060
    %v1075 = vxor.u32 %v1061, 2147483648
    %v1076 = vmul.f32 %v1075, 1.442695
    %v1077 = vpow.pop %v1076
    %v1078 = vadd.f32 %v1077, 1.0
    %v1079 = vrcp.pop %v1078
    %v1080 = vmul.f32 1.0, %v1079
    %v1081 = vld [vmem:[#allocation3] sm:$0xff]
    %v1082 = vmul.f32 %v1073, %v1081
    %v1083 = vmul.f32 %v1067, %v1074
    %v1084 = vadd.f32 %v1082, %v1083
    %v1085 = vtanh.pop %v1084
    %v1086 = vmul.f32 %v1080, %v1085
    %1087 = vst [vmem:[#allocation2] sm:$0xff] %v1086
    %1088 = vst [vmem:[#allocation3] sm:$0xff] %v1084
    %s1089 = scalar_lea.vmem [#allocation9], 48
    %1090 = vst [vmem:[%s1089] sm:$0xff] %v1086
    %s1091 = scalar_lea.vmem [#allocation4], 224
    %v1092 = vld [vmem:[%s1091] sm:$0xff]
    %v1093 = vld [vmem:[%s1091 + $0x8] sm:$0xff]
    %v1094 = vld [vmem:[%s1091 + $0x10] sm:$0xff]
    %v1095 = vld [vmem:[%s1091 + $0x18] sm:$0xff]
    %v1096 = vld [vmem:[#allocation2] sm:$0xff]
    %v1097 = vpack.c.bf16 %v1096, %v1096
    %1098 = vmatprep.subr.bf16.mxu0 %v210
    %1099 = vmatpush1.bf16.msra.mxu0 %v209
    %1100 = vmatprep.subr.bf16.mxu0 %v206
    %1101 = vmatpush1.bf16.msra.mxu0 %v205
    %1102 = vmatprep.subr.bf16.mxu0 %v202
    %1103 = vmatpush1.bf16.msra.mxu0 %v201
    %1104 = vmatprep.subr.bf16.mxu0 %v198
    %1105 = vmatpush1.bf16.msra.mxu0 %v197
    %1106 = vmatprep.subr.bf16.mxu0 %v194
    %1107 = vmatpush1.bf16.msra.mxu0 %v193
    %1108 = vmatprep.subr.bf16.mxu0 %v190
    %1109 = vmatpush1.bf16.msra.mxu0 %v189
    %1110 = vmatprep.subr.bf16.mxu0 %v186
    %1111 = vmatpush1.bf16.msra.mxu0 %v185
    %1112 = vmatprep.subr.bf16.mxu0 %v182
    %1113 = vmatpush1.bf16.msra.mxu0 %v181
    %1114 = vmatprep.subr.bf16.mxu0 0
    %1115 = vmatpush2.bf16.msra.mxu0 0
    %1116 = vmatprep.subr.bf16.mxu0 0
    %1117 = vmatpush2.bf16.msra.mxu0 0
    %1118 = vmatprep.subr.bf16.mxu0 0
    %1119 = vmatpush2.bf16.msra.mxu0 0
    %1120 = vmatprep.subr.bf16.mxu0 0
    %1121 = vmatpush2.bf16.msra.mxu0 0
    %1122 = vmatprep.subr.bf16.mxu0 0
    %1123 = vmatpush2.bf16.msra.mxu0 0
    %1124 = vmatprep.subr.bf16.mxu0 0
    %1125 = vmatpush2.bf16.msra.mxu0 0
    %1126 = vmatprep.subr.bf16.mxu0 0
    %1127 = vmatpush2.bf16.msra.mxu0 0
    %1128 = vmatprep.subr.bf16.mxu0 0
    %1129 = vmatpush2.bf16.msra.mxu0 0
    %1130 = vmatprep.mubr.bf16.mxu0 0
    %1131 = vmatmul.mubr.bf16.gmra.mxu0 %v1097
    %v1132 = vpop.f32.mrf.mxu0
    %v1133 = vadd.f32 0.0, %v1132
    %v1134 = vpop.f32.mrf.mxu0
    %v1135 = vadd.f32 0.0, %v1134
    %v1136 = vpop.f32.mrf.mxu0
    %v1137 = vpop.f32.mrf.mxu0
    %1138 = vdwg.mxu0
    %1139 = vmatprep.subr.bf16.mxu0 %v212
    %1140 = vmatpush1.bf16.msra.mxu0 %v211
    %1141 = vmatprep.subr.bf16.mxu0 %v208
    %1142 = vmatpush1.bf16.msra.mxu0 %v207
    %1143 = vmatprep.subr.bf16.mxu0 %v204
    %1144 = vmatpush1.bf16.msra.mxu0 %v203
    %1145 = vmatprep.subr.bf16.mxu0 %v200
    %1146 = vmatpush1.bf16.msra.mxu0 %v199
    %1147 = vmatprep.subr.bf16.mxu0 %v196
    %1148 = vmatpush1.bf16.msra.mxu0 %v195
    %1149 = vmatprep.subr.bf16.mxu0 %v192
    %1150 = vmatpush1.bf16.msra.mxu0 %v191
    %1151 = vmatprep.subr.bf16.mxu0 %v188
    %1152 = vmatpush1.bf16.msra.mxu0 %v187
    %1153 = vmatprep.subr.bf16.mxu0 %v184
    %1154 = vmatpush1.bf16.msra.mxu0 %v183
    %1155 = vmatprep.subr.bf16.mxu0 0
    %1156 = vmatpush2.bf16.msra.mxu0 0
    %1157 = vmatprep.subr.bf16.mxu0 0
    %1158 = vmatpush2.bf16.msra.mxu0 0
    %1159 = vmatprep.subr.bf16.mxu0 0
    %1160 = vmatpush2.bf16.msra.mxu0 0
    %1161 = vmatprep.subr.bf16.mxu0 0
    %1162 = vmatpush2.bf16.msra.mxu0 0
    %1163 = vmatprep.subr.bf16.mxu0 0
    %1164 = vmatpush2.bf16.msra.mxu0 0
    %1165 = vmatprep.subr.bf16.mxu0 0
    %1166 = vmatpush2.bf16.msra.mxu0 0
    %1167 = vmatprep.subr.bf16.mxu0 0
    %1168 = vmatpush2.bf16.msra.mxu0 0
    %1169 = vmatprep.subr.bf16.mxu0 0
    %1170 = vmatpush2.bf16.msra.mxu0 0
    %1171 = vmatprep.mubr.bf16.mxu0 0
    %1172 = vmatmul.mubr.bf16.gmra.mxu0 %v1097
    %v1173 = vpop.f32.mrf.mxu0
    %v1174 = vadd.f32 0.0, %v1173
    %v1175 = vpop.f32.mrf.mxu0
    %v1176 = vadd.f32 0.0, %v1175
    %v1177 = vpop.f32.mrf.mxu0
    %v1178 = vpop.f32.mrf.mxu0
    %1179 = vdwg.mxu0
    %v1180 = vadd.f32 %v1092, %v1133
    %v1181 = vadd.f32 %v1093, %v1135
    %v1182 = vadd.f32 %v1094, %v1174
    %v1183 = vadd.f32 %v1095, %v1176
    %v1184 = vxor.u32 %v1180, 2147483648
    %v1185 = vmul.f32 %v1184, 1.442695
    %v1186 = vpow.pop %v1185
    %v1187 = vadd.f32 %v1186, 1.0
    %v1188 = vrcp.pop %v1187
    %v1189 = vmul.f32 1.0, %v1188
    %v1190 = vxor.u32 %v1181, 2147483648
    %v1191 = vmul.f32 %v1190, 1.442695
    %v1192 = vpow.pop %v1191
    %v1193 = vadd.f32 %v1192, 1.0
    %v1194 = vrcp.pop %v1193
    %v1195 = vmul.f32 1.0, %v1194
    %v1196 = vtanh.pop %v1182
    %v1197 = vxor.u32 %v1183, 2147483648
    %v1198 = vmul.f32 %v1197, 1.442695
    %v1199 = vpow.pop %v1198
    %v1200 = vadd.f32 %v1199, 1.0
    %v1201 = vrcp.pop %v1200
    %v1202 = vmul.f32 1.0, %v1201
    %v1203 = vld [vmem:[#allocation3] sm:$0xff]
    %v1204 = vmul.f32 %v1195, %v1203
    %v1205 = vmul.f32 %v1189, %v1196
    %v1206 = vadd.f32 %v1204, %v1205
    %v1207 = vtanh.pop %v1206
    %v1208 = vmul.f32 %v1202, %v1207
    %1209 = vst [vmem:[#allocation2] sm:$0xff] %v1208
    %1210 = vst [vmem:[#allocation3] sm:$0xff] %v1206
    %s1211 = scalar_lea.vmem [#allocation9], 56
    %1212 = vst [vmem:[%s1211] sm:$0xff] %v1208
    // Predicated region
    $region22: #{tpu_custom_call.1} parent=1 // pred_check
      _
    $region23: #{tpu_custom_call.1} parent=1 // pred_check_branch
      %1214 = sbr.rel (0) target = $region25
    $region24: #{tpu_custom_call.1} parent=1 // pred_region
      %s1216 = ssub.s32 1024, 1024
      %1217 = vsyncadd [#allocation6], %s1216
      %s1218 = sshll.u32 [#allocation9], 4
      %s1219 = int_to_ptr.vmem [resolvable:$true] %s1218
      %1224 = dma.vmem_to_hbm [thread:$0]  %s1219, 1024, %s2, [#allocation6], 128, 128, 8
    $region25: #{tpu_custom_call.1} parent=1 // pred_fallthru
      _
    // Predicated region
    $region26: #{tpu_custom_call.1} parent=1 // pred_check
      _
    $region27: #{tpu_custom_call.1} parent=1 // pred_check_branch
      %1226 = sbr.rel (0) target = $region29
    $region28: #{tpu_custom_call.1} parent=1 // pred_region
      %1227 = dma.done [#allocation6], 1024
    $region29: #{tpu_custom_call.1} parent=1 // pred_fallthru
      _
    %1228 = vsyncpa [#allocation5], 1
    %1229 = vsyncpa [#allocation8], 1
    %1230 = vsyncpa [#allocation6], 1

</llo_original>
